<compile_context>
chip_gen: v7x
topology: tpu7x:2x2x1
jax: 0.10.0
libtpu: 0.0.40
codegen_flags: <defaults>
</compile_context>

<pallas_src>
import jax
import jax.numpy as jnp
from jax import lax
from jax.experimental import pallas as pl
from jax.experimental.pallas import tpu as pltpu

INPUT = 10        # LSTM input_size
HIDDEN = 64       # LSTM hidden_size
DIN_PAD = 16      # padded feature dim for the input projection (minimal sublane multiple)
B_PAD = 8         # padded batch (sublane width)
NEG_SLOPE = 0.01  # nn.LeakyReLU default


def _leaky(x):
    return jnp.where(x > 0, x, NEG_SLOPE * x)


def rnn_encoder_kernel(x_ref,                      # (T*B_PAD, DIN_PAD) time-major
                       wih1_ref, b1_ref,           # (DIN_PAD, 4H), (1, 4H)  [f,i,o,g], sig cols pre-scaled 0.5
                       whh1_ref,                   # (H, 4H)
                       w2_ref, b2_ref,             # (2H, 4H) = [wih2; whh2], (B_PAD, 4H)
                       wr1_ref, br1_ref,           # (H, H), (1, H)
                       wr2_ref, br2_ref,           # (H, H), (1, H)
                       wfc_ref, bfc_ref,           # (1, H), (1, 1)
                       out_ref,                    # (B_PAD, 1)
                       g1x_ref):                   # scratch ((T-1)*B_PAD, 4H)
    H = HIDDEN
    B = B_PAD
    T = x_ref.shape[0] // B
    f32 = jnp.float32

    # Lane constants for the [o | g] gate vreg: sigmoid(x) = 0.5*tanh(x/2)+0.5 on the o
    # half (the /2 is already folded into the weights host-side), plain tanh on the g half.
    # Built once (whole kernel is one unrolled basic block; no per-iteration broadcasts).
    lane = lax.broadcasted_iota(jnp.int32, (B, 2 * H), 1)
    sig_half = lane < H
    m1 = jnp.where(sig_half, 0.5, 1.0).astype(f32)
    k1 = jnp.where(sig_half, 0.5, 0.0).astype(f32)

    b2 = b2_ref[...]  # already (B, 4H) host-side: no per-step broadcast on the loop path

    def gates_to_hc(g, c):
        # gate columns [f, i, o, g]; vreg0 = [f|i], vreg1 = [o|g]; sigmoid-gate columns
        # arrive pre-scaled by 0.5 so sigmoid == 0.5*tanh(.)+0.5 with no extra scale.
        a0 = 0.5 * jnp.tanh(g[:, :2 * H]) + 0.5      # [sig(f) | sig(i)]
        a1 = jnp.tanh(g[:, 2 * H:]) * m1 + k1        # [sig(o) | tanh(g)]
        prod = a0 * a1                               # [unused | sig(i)*tanh(g)]
        ig = prod[:, H:]                             # the single lane rotate per cell
        c_new = a0[:, :H] * c + ig                   # f*c + i*g   (lane-aligned, no rotate)
        h_new = a1[:, :H] * jnp.tanh(c_new)          # o*tanh(c')  (lane-aligned, no rotate)
        return h_new, c_new

    zeros = jnp.zeros((B, H), f32)

    # ---- t = 0, layer 1: h = c = 0, so only a tiny K=DIN_PAD input projection is on the
    # step-0 critical path (no whh1 stream, no dependence on the big hoisted matmul).
    gx0 = (jnp.dot(x_ref[pl.ds(0, B), :], wih1_ref[...],
                   preferred_element_type=f32) + b1_ref[...])
    h1, c1 = gates_to_hc(gx0, zeros)

    # ---- Hoisted layer-1 input projection for t = 1 .. T-1 (b1 folded in). Issued off the
    # step-0 chain; the recurrence leaves the MXU mostly idle, so this is free filler.
    g1x_ref[...] = (jnp.dot(x_ref[pl.ds(B, (T - 1) * B), :], wih1_ref[...],
                            preferred_element_type=f32) + b1_ref[...])

    def cell1(t, h, c):
        # Layer 1, timestep t >= 1: recurrent half only (input half precomputed above).
        g = (g1x_ref[pl.ds((t - 1) * B, B), :]
             + jnp.dot(h, whh1_ref[...], preferred_element_type=f32))
        return gates_to_hc(g, c)

    def cell2(h1_t, h2_prev, c2_prev):
        # Layer 2: input + recurrent matmuls fused via concatenation. The concat's lane
        # shift depends only on h2_prev (available early); only the select is on the chain.
        z = jnp.concatenate([h1_t, h2_prev], axis=-1)               # (B, 2H)
        g = jnp.dot(z, w2_ref[...], preferred_element_type=f32) + b2
        return gates_to_hc(g, c2_prev)

    # Software-pipeline the two layers by one timestep: cell2(t) and cell1(t+1) both depend
    # only on h1(t), so their MXU/EUP chains overlap. T is tiny & static: full Python unroll.
    h2, c2 = zeros, zeros
    for t in range(T - 1):
        if t == 0:
            # h2 == 0: only the wih2 half of w2 contributes -> skip streaming the whh2 rows.
            g2 = (jnp.dot(h1, w2_ref[pl.ds(0, H), :],
                          preferred_element_type=f32) + b2)
            h2, c2 = gates_to_hc(g2, c2)
        else:
            h2, c2 = cell2(h1, h2, c2)       # top layer, time t      (needs h1(t))
        h1, c1 = cell1(t + 1, h1, c1)        # bottom layer, time t+1 (needs h1(t))
    h2, _ = cell2(h1, h2, c2)                # top layer, final timestep

    # r_out[:, -1, :] == h2 of the top layer at the final timestep.
    r = h2
    y = _leaky(jnp.dot(r, wr1_ref[...], preferred_element_type=f32) + br1_ref[...])
    y = _leaky(jnp.dot(y, wr2_ref[...], preferred_element_type=f32) + br2_ref[...])
    # Final (H -> 1) projection as VPU multiply + lane reduction (no N=1 MXU pass).
    out = jnp.sum((y + r) * wfc_ref[...], axis=-1, keepdims=True) + bfc_ref[...]
    out_ref[...] = _leaky(out)


def _prep_gates(w, axis):
    """PyTorch LSTM gate order [i, f, g, o] -> kernel order [f, i, o, g], with the
    sigmoid-gate (f, i, o) columns pre-scaled by 0.5 (exact power-of-two scale) so the
    kernel evaluates sigmoid(x) as 0.5*tanh(pre)+0.5 with no extra in-loop multiply."""
    i, f, g, o = jnp.split(w, 4, axis=axis)
    return jnp.concatenate([0.5 * f, 0.5 * i, 0.5 * o, g], axis=axis)


def rnn_encoder_pallas(x, params, *, interpret=False):
    """x: (B, T, INPUT) float32. params: dict of unpadded weights (PyTorch gate order)."""
    B, T, D = x.shape
    assert D == INPUT and B <= B_PAD and T >= 2
    H = HIDDEN

    # Time-major, batch padded to 8 sublanes, features zero-padded to DIN_PAD lanes,
    # flattened to 2D (T*B_PAD, DIN_PAD). Zero padding is inert.
    x_pad = jnp.zeros((T, B_PAD, DIN_PAD), jnp.float32)
    x_pad = x_pad.at[:, :B, :D].set(jnp.transpose(x, (1, 0, 2)))
    x_pad = x_pad.reshape(T * B_PAD, DIN_PAD)

    wih1 = jnp.zeros((DIN_PAD, 4 * H), jnp.float32).at[:D, :].set(params["wih1"])
    wih1 = _prep_gates(wih1, 1)
    b1 = _prep_gates(params["b1"], 1)
    whh1 = _prep_gates(params["whh1"], 1)
    # Fused layer-2 weight: [wih2 ; whh2] stacked along the contraction dim.
    w2 = _prep_gates(jnp.concatenate([params["wih2"], params["whh2"]], axis=0), 1)
    # Pre-broadcast the per-step bias once host-side.
    b2 = jnp.broadcast_to(_prep_gates(params["b2"], 1), (B_PAD, 4 * H))
    wfc_row = jnp.transpose(params["wfc"])    # (1, H)

    vmem = pl.BlockSpec(memory_space=pltpu.MemorySpace.VMEM)
    args = (x_pad, wih1, b1, whh1, w2, b2,
            params["wr1"], params["br1"], params["wr2"], params["br2"],
            wfc_row, params["bfc"])

    out = pl.pallas_call(
        rnn_encoder_kernel,
        out_shape=jax.ShapeDtypeStruct((B_PAD, 1), jnp.float32),
        in_specs=[vmem] * len(args),
        out_specs=vmem,
        scratch_shapes=[pltpu.VMEM(((T - 1) * B_PAD, 4 * H), jnp.float32)],
        interpret=interpret,
    )(*args)
    return out[:B, :]


def rnn_encoder_reference(x, params):
    """Pure-JAX reference matching PyTorch eval-mode semantics (natural gate order)."""
    B, T, _ = x.shape
    H = HIDDEN

    def cell(xt, h, c, wih, whh, b):
        g = xt @ wih + h @ whh + b
        i = jax.nn.sigmoid(g[:, 0 * H:1 * H])
        f = jax.nn.sigmoid(g[:, 1 * H:2 * H])
        gg = jnp.tanh(g[:, 2 * H:3 * H])
        o = jax.nn.sigmoid(g[:, 3 * H:4 * H])
        c = f * c + i * gg
        h = o * jnp.tanh(c)
        return h, c

    h1 = c1 = h2 = c2 = jnp.zeros((B, H), jnp.float32)
    for t in range(T):
        xt = x[:, t, :]
        h1, c1 = cell(xt, h1, c1, params["wih1"], params["whh1"], params["b1"])
        h2, c2 = cell(h1, h2, c2, params["wih2"], params["whh2"], params["b2"])
    r = h2
    y = _leaky(r @ params["wr1"] + params["br1"])
    y = _leaky(y @ params["wr2"] + params["br2"])
    return _leaky((y + r) @ params["wfc"] + params["bfc"])


def init_params(key):
    """Deterministic init mimicking PyTorch's U(-1/sqrt(H), 1/sqrt(H)).
    Note: PyTorch has bias_ih + bias_hh per layer; a single combined bias is the
    equivalent forward (sum them — in PyTorch's [i,f,g,o] order — when importing
    real weights; the kernel-side [f,i,o,g] permutation/scaling happens in _prep_gates)."""
    k = 1.0 / jnp.sqrt(jnp.float32(HIDDEN))
    names_shapes = [
        ("wih1", (INPUT, 4 * HIDDEN)), ("whh1", (HIDDEN, 4 * HIDDEN)), ("b1", (1, 4 * HIDDEN)),
        ("wih2", (HIDDEN, 4 * HIDDEN)), ("whh2", (HIDDEN, 4 * HIDDEN)), ("b2", (1, 4 * HIDDEN)),
        ("wr1", (HIDDEN, HIDDEN)), ("br1", (1, HIDDEN)),
        ("wr2", (HIDDEN, HIDDEN)), ("br2", (1, HIDDEN)),
        ("wfc", (HIDDEN, 1)), ("bfc", (1, 1)),
    ]
    keys = jax.random.split(key, len(names_shapes))
    return {n: jax.random.uniform(kk, s, jnp.float32, -k, k)
            for kk, (n, s) in zip(keys, names_shapes)}


if __name__ == "__main__":
    key = jax.random.PRNGKey(0)
    pkey, xkey = jax.random.split(key)
    params = init_params(pkey)

    B, T = 2, 8
    x = jax.random.normal(xkey, (B, T, INPUT), jnp.float32)

    out = jax.block_until_ready(rnn_encoder_pallas(x, params))
    ref = rnn_encoder_reference(x, params)

    assert out.shape == (B, 1), out.shape
    # Compiled-path tolerance absorbs MXU default-precision rounding on f32 dots (the
    # XLA reference also runs at TPU default precision) plus reassociation from the
    # hoisted / fused matmuls.
    assert jnp.allclose(out, ref, rtol=2e-2, atol=2e-2), (out, ref)

    # Review correctness concern: the loose TPU tolerance alone could hide a gate
    # permutation / scaling / padding bug. Cross-check the identical kernel trace in
    # Pallas interpret mode with f32-exact matmuls against the reference, tightly.
    with jax.default_matmul_precision("highest"):
        out_hi = jax.block_until_ready(rnn_encoder_pallas(x, params, interpret=True))
        ref_hi = rnn_encoder_reference(x, params)
    assert jnp.allclose(out_hi, ref_hi, rtol=1e-5, atol=1e-5), (out_hi, ref_hi)

    print("KERNEL_OK")
</pallas_src>

<mosaic_0001>
module attributes {stable_mosaic.version = 11 : i64} {
  func.func @rnn_encoder_kernel(%arg0: memref<64x16xf32, #tpu.memory_space<vmem>>, %arg1: memref<16x256xf32, #tpu.memory_space<vmem>>, %arg2: memref<1x256xf32, #tpu.memory_space<vmem>>, %arg3: memref<64x256xf32, #tpu.memory_space<vmem>>, %arg4: memref<128x256xf32, #tpu.memory_space<vmem>>, %arg5: memref<8x256xf32, #tpu.memory_space<vmem>>, %arg6: memref<64x64xf32, #tpu.memory_space<vmem>>, %arg7: memref<1x64xf32, #tpu.memory_space<vmem>>, %arg8: memref<64x64xf32, #tpu.memory_space<vmem>>, %arg9: memref<1x64xf32, #tpu.memory_space<vmem>>, %arg10: memref<1x64xf32, #tpu.memory_space<vmem>>, %arg11: memref<1x1xf32, #tpu.memory_space<vmem>>, %arg12: memref<8x1xf32, #tpu.memory_space<vmem>>, %arg13: memref<56x256xf32, #tpu.memory_space<vmem>>) attributes {dimension_semantics = [], scalar_prefetch = 0 : i64, scratch_operands = 1 : i64, tpu.core_type = #tpu.core_type<tc>} {
    %0 = tpu.iota {dimensions = array<i32: 1>} : vector<8x128xi32>
    %c64_i32 = arith.constant 64 : i32
    %1 = vector.broadcast %c64_i32 : i32 to vector<8x128xi32>
    %2 = arith.cmpi slt, %0, %1 : vector<8x128xi32>
    %cst = arith.constant 5.000000e-01 : f32
    %cst_0 = arith.constant 1.000000e+00 : f32
    %3 = vector.broadcast %cst : f32 to vector<8x128xf32>
    %4 = vector.broadcast %cst_0 : f32 to vector<8x128xf32>
    %5 = arith.select %2, %3, %4 : vector<8x128xi1>, vector<8x128xf32>
    %cst_1 = arith.constant 5.000000e-01 : f32
    %cst_2 = arith.constant 0.000000e+00 : f32
    %6 = vector.broadcast %cst_1 : f32 to vector<8x128xf32>
    %7 = vector.broadcast %cst_2 : f32 to vector<8x128xf32>
    %8 = arith.select %2, %6, %7 : vector<8x128xi1>, vector<8x128xf32>
    %c0 = arith.constant 0 : index
    %c0_3 = arith.constant 0 : index
    %9 = vector.load %arg5[%c0, %c0_3] : memref<8x256xf32, #tpu.memory_space<vmem>>, vector<8x256xf32>
    %cst_4 = arith.constant 0.000000e+00 : f32
    %10 = vector.broadcast %cst_4 : f32 to vector<8x64xf32>
    %c0_5 = arith.constant 0 : index
    %c0_6 = arith.constant 0 : index
    %11 = vector.load %arg0[%c0_5, %c0_6] : memref<64x16xf32, #tpu.memory_space<vmem>>, vector<8x16xf32>
    %c0_7 = arith.constant 0 : index
    %c0_8 = arith.constant 0 : index
    %12 = vector.load %arg1[%c0_7, %c0_8] : memref<16x256xf32, #tpu.memory_space<vmem>>, vector<16x256xf32>
    %cst_9 = arith.constant dense<0.000000e+00> : vector<8x256xf32>
    %13 = tpu.matmul %11, %12, %cst_9 {dimension_numbers = #tpu.dot_dimension_numbers<[1], [0], [0], [1], [0, 0, 1, 1], [], []>} : vector<8x16xf32>, vector<16x256xf32>, vector<8x256xf32> -> vector<8x256xf32>
    %c0_10 = arith.constant 0 : index
    %c0_11 = arith.constant 0 : index
    %14 = vector.load %arg2[%c0_10, %c0_11] : memref<1x256xf32, #tpu.memory_space<vmem>>, vector<1x256xf32>
    %15 = vector.broadcast %14 : vector<1x256xf32> to vector<8x256xf32>
    %16 = arith.addf %13, %15 : vector<8x256xf32>
    %17 = vector.extract_strided_slice %16 {offsets = [0, 0], sizes = [8, 128], strides = [1, 1]} : vector<8x256xf32> to vector<8x128xf32>
    %18 = math.tanh %17 : vector<8x128xf32>
    %cst_12 = arith.constant 5.000000e-01 : f32
    %19 = vector.broadcast %cst_12 : f32 to vector<8x128xf32>
    %20 = arith.mulf %19, %18 : vector<8x128xf32>
    %cst_13 = arith.constant 5.000000e-01 : f32
    %21 = vector.broadcast %cst_13 : f32 to vector<8x128xf32>
    %22 = arith.addf %20, %21 : vector<8x128xf32>
    %23 = vector.extract_strided_slice %16 {offsets = [0, 128], sizes = [8, 128], strides = [1, 1]} : vector<8x256xf32> to vector<8x128xf32>
    %24 = math.tanh %23 : vector<8x128xf32>
    %25 = arith.mulf %24, %5 : vector<8x128xf32>
    %26 = arith.addf %25, %8 : vector<8x128xf32>
    %27 = arith.mulf %22, %26 : vector<8x128xf32>
    %28 = vector.extract_strided_slice %27 {offsets = [0, 64], sizes = [8, 64], strides = [1, 1]} : vector<8x128xf32> to vector<8x64xf32>
    %29 = vector.extract_strided_slice %22 {offsets = [0, 0], sizes = [8, 64], strides = [1, 1]} : vector<8x128xf32> to vector<8x64xf32>
    %30 = arith.mulf %29, %10 : vector<8x64xf32>
    %31 = arith.addf %30, %28 : vector<8x64xf32>
    %32 = vector.extract_strided_slice %26 {offsets = [0, 0], sizes = [8, 64], strides = [1, 1]} : vector<8x128xf32> to vector<8x64xf32>
    %33 = math.tanh %31 : vector<8x64xf32>
    %34 = arith.mulf %32, %33 : vector<8x64xf32>
    %c8 = arith.constant 8 : index
    %c0_14 = arith.constant 0 : index
    %35 = vector.load %arg0[%c8, %c0_14] : memref<64x16xf32, #tpu.memory_space<vmem>>, vector<56x16xf32>
    %c0_15 = arith.constant 0 : index
    %c0_16 = arith.constant 0 : index
    %36 = vector.load %arg1[%c0_15, %c0_16] : memref<16x256xf32, #tpu.memory_space<vmem>>, vector<16x256xf32>
    %cst_17 = arith.constant dense<0.000000e+00> : vector<56x256xf32>
    %37 = tpu.matmul %35, %36, %cst_17 {dimension_numbers = #tpu.dot_dimension_numbers<[1], [0], [0], [1], [0, 0, 1, 1], [], []>} : vector<56x16xf32>, vector<16x256xf32>, vector<56x256xf32> -> vector<56x256xf32>
    %c0_18 = arith.constant 0 : index
    %c0_19 = arith.constant 0 : index
    %38 = vector.load %arg2[%c0_18, %c0_19] : memref<1x256xf32, #tpu.memory_space<vmem>>, vector<1x256xf32>
    %39 = vector.broadcast %38 : vector<1x256xf32> to vector<56x256xf32>
    %40 = arith.addf %37, %39 : vector<56x256xf32>
    %c0_20 = arith.constant 0 : index
    %c0_21 = arith.constant 0 : index
    %41 = vector.load %arg13[%c0_20, %c0_21] : memref<56x256xf32, #tpu.memory_space<vmem>>, vector<56x256xf32>
    tpu.vector_store %arg13[%c0_20, %c0_21], %40 {strides = array<i32>} : memref<56x256xf32, #tpu.memory_space<vmem>>, vector<56x256xf32>,
    %c0_22 = arith.constant 0 : index
    %c0_23 = arith.constant 0 : index
    %42 = vector.load %arg4[%c0_22, %c0_23] : memref<128x256xf32, #tpu.memory_space<vmem>>, vector<64x256xf32>
    %cst_24 = arith.constant dense<0.000000e+00> : vector<8x256xf32>
    %43 = tpu.matmul %34, %42, %cst_24 {dimension_numbers = #tpu.dot_dimension_numbers<[1], [0], [0], [1], [0, 0, 1, 1], [], []>} : vector<8x64xf32>, vector<64x256xf32>, vector<8x256xf32> -> vector<8x256xf32>
    %44 = arith.addf %43, %9 : vector<8x256xf32>
    %45 = vector.extract_strided_slice %44 {offsets = [0, 0], sizes = [8, 128], strides = [1, 1]} : vector<8x256xf32> to vector<8x128xf32>
    %46 = math.tanh %45 : vector<8x128xf32>
    %cst_25 = arith.constant 5.000000e-01 : f32
    %47 = vector.broadcast %cst_25 : f32 to vector<8x128xf32>
    %48 = arith.mulf %47, %46 : vector<8x128xf32>
    %cst_26 = arith.constant 5.000000e-01 : f32
    %49 = vector.broadcast %cst_26 : f32 to vector<8x128xf32>
    %50 = arith.addf %48, %49 : vector<8x128xf32>
    %51 = vector.extract_strided_slice %44 {offsets = [0, 128], sizes = [8, 128], strides = [1, 1]} : vector<8x256xf32> to vector<8x128xf32>
    %52 = math.tanh %51 : vector<8x128xf32>
    %53 = arith.mulf %52, %5 : vector<8x128xf32>
    %54 = arith.addf %53, %8 : vector<8x128xf32>
    %55 = arith.mulf %50, %54 : vector<8x128xf32>
    %56 = vector.extract_strided_slice %55 {offsets = [0, 64], sizes = [8, 64], strides = [1, 1]} : vector<8x128xf32> to vector<8x64xf32>
    %57 = vector.extract_strided_slice %50 {offsets = [0, 0], sizes = [8, 64], strides = [1, 1]} : vector<8x128xf32> to vector<8x64xf32>
    %58 = arith.mulf %57, %10 : vector<8x64xf32>
    %59 = arith.addf %58, %56 : vector<8x64xf32>
    %60 = vector.extract_strided_slice %54 {offsets = [0, 0], sizes = [8, 64], strides = [1, 1]} : vector<8x128xf32> to vector<8x64xf32>
    %61 = math.tanh %59 : vector<8x64xf32>
    %62 = arith.mulf %60, %61 : vector<8x64xf32>
    %c0_27 = arith.constant 0 : index
    %c0_28 = arith.constant 0 : index
    %63 = vector.load %arg13[%c0_27, %c0_28] : memref<56x256xf32, #tpu.memory_space<vmem>>, vector<8x256xf32>
    %c0_29 = arith.constant 0 : index
    %c0_30 = arith.constant 0 : index
    %64 = vector.load %arg3[%c0_29, %c0_30] : memref<64x256xf32, #tpu.memory_space<vmem>>, vector<64x256xf32>
    %cst_31 = arith.constant dense<0.000000e+00> : vector<8x256xf32>
    %65 = tpu.matmul %34, %64, %cst_31 {dimension_numbers = #tpu.dot_dimension_numbers<[1], [0], [0], [1], [0, 0, 1, 1], [], []>} : vector<8x64xf32>, vector<64x256xf32>, vector<8x256xf32> -> vector<8x256xf32>
    %66 = arith.addf %63, %65 : vector<8x256xf32>
    %67 = vector.extract_strided_slice %66 {offsets = [0, 0], sizes = [8, 128], strides = [1, 1]} : vector<8x256xf32> to vector<8x128xf32>
    %68 = math.tanh %67 : vector<8x128xf32>
    %cst_32 = arith.constant 5.000000e-01 : f32
    %69 = vector.broadcast %cst_32 : f32 to vector<8x128xf32>
    %70 = arith.mulf %69, %68 : vector<8x128xf32>
    %cst_33 = arith.constant 5.000000e-01 : f32
    %71 = vector.broadcast %cst_33 : f32 to vector<8x128xf32>
    %72 = arith.addf %70, %71 : vector<8x128xf32>
    %73 = vector.extract_strided_slice %66 {offsets = [0, 128], sizes = [8, 128], strides = [1, 1]} : vector<8x256xf32> to vector<8x128xf32>
    %74 = math.tanh %73 : vector<8x128xf32>
    %75 = arith.mulf %74, %5 : vector<8x128xf32>
    %76 = arith.addf %75, %8 : vector<8x128xf32>
    %77 = arith.mulf %72, %76 : vector<8x128xf32>
    %78 = vector.extract_strided_slice %77 {offsets = [0, 64], sizes = [8, 64], strides = [1, 1]} : vector<8x128xf32> to vector<8x64xf32>
    %79 = vector.extract_strided_slice %72 {offsets = [0, 0], sizes = [8, 64], strides = [1, 1]} : vector<8x128xf32> to vector<8x64xf32>
    %80 = arith.mulf %79, %31 : vector<8x64xf32>
    %81 = arith.addf %80, %78 : vector<8x64xf32>
    %82 = vector.extract_strided_slice %76 {offsets = [0, 0], sizes = [8, 64], strides = [1, 1]} : vector<8x128xf32> to vector<8x64xf32>
    %83 = math.tanh %81 : vector<8x64xf32>
    %84 = arith.mulf %82, %83 : vector<8x64xf32>
    %85 = tpu.concatenate %84, %62 in 1 : vector<8x64xf32>, vector<8x64xf32> -> vector<8x128xf32>
    %c0_34 = arith.constant 0 : index
    %c0_35 = arith.constant 0 : index
    %86 = vector.load %arg4[%c0_34, %c0_35] : memref<128x256xf32, #tpu.memory_space<vmem>>, vector<128x256xf32>
    %cst_36 = arith.constant dense<0.000000e+00> : vector<8x256xf32>
    %87 = tpu.matmul %85, %86, %cst_36 {dimension_numbers = #tpu.dot_dimension_numbers<[1], [0], [0], [1], [0, 0, 1, 1], [], []>} : vector<8x128xf32>, vector<128x256xf32>, vector<8x256xf32> -> vector<8x256xf32>
    %88 = arith.addf %87, %9 : vector<8x256xf32>
    %89 = vector.extract_strided_slice %88 {offsets = [0, 0], sizes = [8, 128], strides = [1, 1]} : vector<8x256xf32> to vector<8x128xf32>
    %90 = math.tanh %89 : vector<8x128xf32>
    %cst_37 = arith.constant 5.000000e-01 : f32
    %91 = vector.broadcast %cst_37 : f32 to vector<8x128xf32>
    %92 = arith.mulf %91, %90 : vector<8x128xf32>
    %cst_38 = arith.constant 5.000000e-01 : f32
    %93 = vector.broadcast %cst_38 : f32 to vector<8x128xf32>
    %94 = arith.addf %92, %93 : vector<8x128xf32>
    %95 = vector.extract_strided_slice %88 {offsets = [0, 128], sizes = [8, 128], strides = [1, 1]} : vector<8x256xf32> to vector<8x128xf32>
    %96 = math.tanh %95 : vector<8x128xf32>
    %97 = arith.mulf %96, %5 : vector<8x128xf32>
    %98 = arith.addf %97, %8 : vector<8x128xf32>
    %99 = arith.mulf %94, %98 : vector<8x128xf32>
    %100 = vector.extract_strided_slice %99 {offsets = [0, 64], sizes = [8, 64], strides = [1, 1]} : vector<8x128xf32> to vector<8x64xf32>
    %101 = vector.extract_strided_slice %94 {offsets = [0, 0], sizes = [8, 64], strides = [1, 1]} : vector<8x128xf32> to vector<8x64xf32>
    %102 = arith.mulf %101, %59 : vector<8x64xf32>
    %103 = arith.addf %102, %100 : vector<8x64xf32>
    %104 = vector.extract_strided_slice %98 {offsets = [0, 0], sizes = [8, 64], strides = [1, 1]} : vector<8x128xf32> to vector<8x64xf32>
    %105 = math.tanh %103 : vector<8x64xf32>
    %106 = arith.mulf %104, %105 : vector<8x64xf32>
    %c8_39 = arith.constant 8 : index
    %c0_40 = arith.constant 0 : index
    %107 = vector.load %arg13[%c8_39, %c0_40] : memref<56x256xf32, #tpu.memory_space<vmem>>, vector<8x256xf32>
    %c0_41 = arith.constant 0 : index
    %c0_42 = arith.constant 0 : index
    %108 = vector.load %arg3[%c0_41, %c0_42] : memref<64x256xf32, #tpu.memory_space<vmem>>, vector<64x256xf32>
    %cst_43 = arith.constant dense<0.000000e+00> : vector<8x256xf32>
    %109 = tpu.matmul %84, %108, %cst_43 {dimension_numbers = #tpu.dot_dimension_numbers<[1], [0], [0], [1], [0, 0, 1, 1], [], []>} : vector<8x64xf32>, vector<64x256xf32>, vector<8x256xf32> -> vector<8x256xf32>
    %110 = arith.addf %107, %109 : vector<8x256xf32>
    %111 = vector.extract_strided_slice %110 {offsets = [0, 0], sizes = [8, 128], strides = [1, 1]} : vector<8x256xf32> to vector<8x128xf32>
    %112 = math.tanh %111 : vector<8x128xf32>
    %cst_44 = arith.constant 5.000000e-01 : f32
    %113 = vector.broadcast %cst_44 : f32 to vector<8x128xf32>
    %114 = arith.mulf %113, %112 : vector<8x128xf32>
    %cst_45 = arith.constant 5.000000e-01 : f32
    %115 = vector.broadcast %cst_45 : f32 to vector<8x128xf32>
    %116 = arith.addf %114, %115 : vector<8x128xf32>
    %117 = vector.extract_strided_slice %110 {offsets = [0, 128], sizes = [8, 128], strides = [1, 1]} : vector<8x256xf32> to vector<8x128xf32>
    %118 = math.tanh %117 : vector<8x128xf32>
    %119 = arith.mulf %118, %5 : vector<8x128xf32>
    %120 = arith.addf %119, %8 : vector<8x128xf32>
    %121 = arith.mulf %116, %120 : vector<8x128xf32>
    %122 = vector.extract_strided_slice %121 {offsets = [0, 64], sizes = [8, 64], strides = [1, 1]} : vector<8x128xf32> to vector<8x64xf32>
    %123 = vector.extract_strided_slice %116 {offsets = [0, 0], sizes = [8, 64], strides = [1, 1]} : vector<8x128xf32> to vector<8x64xf32>
    %124 = arith.mulf %123, %81 : vector<8x64xf32>
    %125 = arith.addf %124, %122 : vector<8x64xf32>
    %126 = vector.extract_strided_slice %120 {offsets = [0, 0], sizes = [8, 64], strides = [1, 1]} : vector<8x128xf32> to vector<8x64xf32>
    %127 = math.tanh %125 : vector<8x64xf32>
    %128 = arith.mulf %126, %127 : vector<8x64xf32>
    %129 = tpu.concatenate %128, %106 in 1 : vector<8x64xf32>, vector<8x64xf32> -> vector<8x128xf32>
    %c0_46 = arith.constant 0 : index
    %c0_47 = arith.constant 0 : index
    %130 = vector.load %arg4[%c0_46, %c0_47] : memref<128x256xf32, #tpu.memory_space<vmem>>, vector<128x256xf32>
    %cst_48 = arith.constant dense<0.000000e+00> : vector<8x256xf32>
    %131 = tpu.matmul %129, %130, %cst_48 {dimension_numbers = #tpu.dot_dimension_numbers<[1], [0], [0], [1], [0, 0, 1, 1], [], []>} : vector<8x128xf32>, vector<128x256xf32>, vector<8x256xf32> -> vector<8x256xf32>
    %132 = arith.addf %131, %9 : vector<8x256xf32>
    %133 = vector.extract_strided_slice %132 {offsets = [0, 0], sizes = [8, 128], strides = [1, 1]} : vector<8x256xf32> to vector<8x128xf32>
    %134 = math.tanh %133 : vector<8x128xf32>
    %cst_49 = arith.constant 5.000000e-01 : f32
    %135 = vector.broadcast %cst_49 : f32 to vector<8x128xf32>
    %136 = arith.mulf %135, %134 : vector<8x128xf32>
    %cst_50 = arith.constant 5.000000e-01 : f32
    %137 = vector.broadcast %cst_50 : f32 to vector<8x128xf32>
    %138 = arith.addf %136, %137 : vector<8x128xf32>
    %139 = vector.extract_strided_slice %132 {offsets = [0, 128], sizes = [8, 128], strides = [1, 1]} : vector<8x256xf32> to vector<8x128xf32>
    %140 = math.tanh %139 : vector<8x128xf32>
    %141 = arith.mulf %140, %5 : vector<8x128xf32>
    %142 = arith.addf %141, %8 : vector<8x128xf32>
    %143 = arith.mulf %138, %142 : vector<8x128xf32>
    %144 = vector.extract_strided_slice %143 {offsets = [0, 64], sizes = [8, 64], strides = [1, 1]} : vector<8x128xf32> to vector<8x64xf32>
    %145 = vector.extract_strided_slice %138 {offsets = [0, 0], sizes = [8, 64], strides = [1, 1]} : vector<8x128xf32> to vector<8x64xf32>
    %146 = arith.mulf %145, %103 : vector<8x64xf32>
    %147 = arith.addf %146, %144 : vector<8x64xf32>
    %148 = vector.extract_strided_slice %142 {offsets = [0, 0], sizes = [8, 64], strides = [1, 1]} : vector<8x128xf32> to vector<8x64xf32>
    %149 = math.tanh %147 : vector<8x64xf32>
    %150 = arith.mulf %148, %149 : vector<8x64xf32>
    %c16 = arith.constant 16 : index
    %c0_51 = arith.constant 0 : index
    %151 = vector.load %arg13[%c16, %c0_51] : memref<56x256xf32, #tpu.memory_space<vmem>>, vector<8x256xf32>
    %c0_52 = arith.constant 0 : index
    %c0_53 = arith.constant 0 : index
    %152 = vector.load %arg3[%c0_52, %c0_53] : memref<64x256xf32, #tpu.memory_space<vmem>>, vector<64x256xf32>
    %cst_54 = arith.constant dense<0.000000e+00> : vector<8x256xf32>
    %153 = tpu.matmul %128, %152, %cst_54 {dimension_numbers = #tpu.dot_dimension_numbers<[1], [0], [0], [1], [0, 0, 1, 1], [], []>} : vector<8x64xf32>, vector<64x256xf32>, vector<8x256xf32> -> vector<8x256xf32>
    %154 = arith.addf %151, %153 : vector<8x256xf32>
    %155 = vector.extract_strided_slice %154 {offsets = [0, 0], sizes = [8, 128], strides = [1, 1]} : vector<8x256xf32> to vector<8x128xf32>
    %156 = math.tanh %155 : vector<8x128xf32>
    %cst_55 = arith.constant 5.000000e-01 : f32
    %157 = vector.broadcast %cst_55 : f32 to vector<8x128xf32>
    %158 = arith.mulf %157, %156 : vector<8x128xf32>
    %cst_56 = arith.constant 5.000000e-01 : f32
    %159 = vector.broadcast %cst_56 : f32 to vector<8x128xf32>
    %160 = arith.addf %158, %159 : vector<8x128xf32>
    %161 = vector.extract_strided_slice %154 {offsets = [0, 128], sizes = [8, 128], strides = [1, 1]} : vector<8x256xf32> to vector<8x128xf32>
    %162 = math.tanh %161 : vector<8x128xf32>
    %163 = arith.mulf %162, %5 : vector<8x128xf32>
    %164 = arith.addf %163, %8 : vector<8x128xf32>
    %165 = arith.mulf %160, %164 : vector<8x128xf32>
    %166 = vector.extract_strided_slice %165 {offsets = [0, 64], sizes = [8, 64], strides = [1, 1]} : vector<8x128xf32> to vector<8x64xf32>
    %167 = vector.extract_strided_slice %160 {offsets = [0, 0], sizes = [8, 64], strides = [1, 1]} : vector<8x128xf32> to vector<8x64xf32>
    %168 = arith.mulf %167, %125 : vector<8x64xf32>
    %169 = arith.addf %168, %166 : vector<8x64xf32>
    %170 = vector.extract_strided_slice %164 {offsets = [0, 0], sizes = [8, 64], strides = [1, 1]} : vector<8x128xf32> to vector<8x64xf32>
    %171 = math.tanh %169 : vector<8x64xf32>
    %172 = arith.mulf %170, %171 : vector<8x64xf32>
    %173 = tpu.concatenate %172, %150 in 1 : vector<8x64xf32>, vector<8x64xf32> -> vector<8x128xf32>
    %c0_57 = arith.constant 0 : index
    %c0_58 = arith.constant 0 : index
    %174 = vector.load %arg4[%c0_57, %c0_58] : memref<128x256xf32, #tpu.memory_space<vmem>>, vector<128x256xf32>
    %cst_59 = arith.constant dense<0.000000e+00> : vector<8x256xf32>
    %175 = tpu.matmul %173, %174, %cst_59 {dimension_numbers = #tpu.dot_dimension_numbers<[1], [0], [0], [1], [0, 0, 1, 1], [], []>} : vector<8x128xf32>, vector<128x256xf32>, vector<8x256xf32> -> vector<8x256xf32>
    %176 = arith.addf %175, %9 : vector<8x256xf32>
    %177 = vector.extract_strided_slice %176 {offsets = [0, 0], sizes = [8, 128], strides = [1, 1]} : vector<8x256xf32> to vector<8x128xf32>
    %178 = math.tanh %177 : vector<8x128xf32>
    %cst_60 = arith.constant 5.000000e-01 : f32
    %179 = vector.broadcast %cst_60 : f32 to vector<8x128xf32>
    %180 = arith.mulf %179, %178 : vector<8x128xf32>
    %cst_61 = arith.constant 5.000000e-01 : f32
    %181 = vector.broadcast %cst_61 : f32 to vector<8x128xf32>
    %182 = arith.addf %180, %181 : vector<8x128xf32>
    %183 = vector.extract_strided_slice %176 {offsets = [0, 128], sizes = [8, 128], strides = [1, 1]} : vector<8x256xf32> to vector<8x128xf32>
    %184 = math.tanh %183 : vector<8x128xf32>
    %185 = arith.mulf %184, %5 : vector<8x128xf32>
    %186 = arith.addf %185, %8 : vector<8x128xf32>
    %187 = arith.mulf %182, %186 : vector<8x128xf32>
    %188 = vector.extract_strided_slice %187 {offsets = [0, 64], sizes = [8, 64], strides = [1, 1]} : vector<8x128xf32> to vector<8x64xf32>
    %189 = vector.extract_strided_slice %182 {offsets = [0, 0], sizes = [8, 64], strides = [1, 1]} : vector<8x128xf32> to vector<8x64xf32>
    %190 = arith.mulf %189, %147 : vector<8x64xf32>
    %191 = arith.addf %190, %188 : vector<8x64xf32>
    %192 = vector.extract_strided_slice %186 {offsets = [0, 0], sizes = [8, 64], strides = [1, 1]} : vector<8x128xf32> to vector<8x64xf32>
    %193 = math.tanh %191 : vector<8x64xf32>
    %194 = arith.mulf %192, %193 : vector<8x64xf32>
    %c24 = arith.constant 24 : index
    %c0_62 = arith.constant 0 : index
    %195 = vector.load %arg13[%c24, %c0_62] : memref<56x256xf32, #tpu.memory_space<vmem>>, vector<8x256xf32>
    %c0_63 = arith.constant 0 : index
    %c0_64 = arith.constant 0 : index
    %196 = vector.load %arg3[%c0_63, %c0_64] : memref<64x256xf32, #tpu.memory_space<vmem>>, vector<64x256xf32>
    %cst_65 = arith.constant dense<0.000000e+00> : vector<8x256xf32>
    %197 = tpu.matmul %172, %196, %cst_65 {dimension_numbers = #tpu.dot_dimension_numbers<[1], [0], [0], [1], [0, 0, 1, 1], [], []>} : vector<8x64xf32>, vector<64x256xf32>, vector<8x256xf32> -> vector<8x256xf32>
    %198 = arith.addf %195, %197 : vector<8x256xf32>
    %199 = vector.extract_strided_slice %198 {offsets = [0, 0], sizes = [8, 128], strides = [1, 1]} : vector<8x256xf32> to vector<8x128xf32>
    %200 = math.tanh %199 : vector<8x128xf32>
    %cst_66 = arith.constant 5.000000e-01 : f32
    %201 = vector.broadcast %cst_66 : f32 to vector<8x128xf32>
    %202 = arith.mulf %201, %200 : vector<8x128xf32>
    %cst_67 = arith.constant 5.000000e-01 : f32
    %203 = vector.broadcast %cst_67 : f32 to vector<8x128xf32>
    %204 = arith.addf %202, %203 : vector<8x128xf32>
    %205 = vector.extract_strided_slice %198 {offsets = [0, 128], sizes = [8, 128], strides = [1, 1]} : vector<8x256xf32> to vector<8x128xf32>
    %206 = math.tanh %205 : vector<8x128xf32>
    %207 = arith.mulf %206, %5 : vector<8x128xf32>
    %208 = arith.addf %207, %8 : vector<8x128xf32>
    %209 = arith.mulf %204, %208 : vector<8x128xf32>
    %210 = vector.extract_strided_slice %209 {offsets = [0, 64], sizes = [8, 64], strides = [1, 1]} : vector<8x128xf32> to vector<8x64xf32>
    %211 = vector.extract_strided_slice %204 {offsets = [0, 0], sizes = [8, 64], strides = [1, 1]} : vector<8x128xf32> to vector<8x64xf32>
    %212 = arith.mulf %211, %169 : vector<8x64xf32>
    %213 = arith.addf %212, %210 : vector<8x64xf32>
    %214 = vector.extract_strided_slice %208 {offsets = [0, 0], sizes = [8, 64], strides = [1, 1]} : vector<8x128xf32> to vector<8x64xf32>
    %215 = math.tanh %213 : vector<8x64xf32>
    %216 = arith.mulf %214, %215 : vector<8x64xf32>
    %217 = tpu.concatenate %216, %194 in 1 : vector<8x64xf32>, vector<8x64xf32> -> vector<8x128xf32>
    %c0_68 = arith.constant 0 : index
    %c0_69 = arith.constant 0 : index
    %218 = vector.load %arg4[%c0_68, %c0_69] : memref<128x256xf32, #tpu.memory_space<vmem>>, vector<128x256xf32>
    %cst_70 = arith.constant dense<0.000000e+00> : vector<8x256xf32>
    %219 = tpu.matmul %217, %218, %cst_70 {dimension_numbers = #tpu.dot_dimension_numbers<[1], [0], [0], [1], [0, 0, 1, 1], [], []>} : vector<8x128xf32>, vector<128x256xf32>, vector<8x256xf32> -> vector<8x256xf32>
    %220 = arith.addf %219, %9 : vector<8x256xf32>
    %221 = vector.extract_strided_slice %220 {offsets = [0, 0], sizes = [8, 128], strides = [1, 1]} : vector<8x256xf32> to vector<8x128xf32>
    %222 = math.tanh %221 : vector<8x128xf32>
    %cst_71 = arith.constant 5.000000e-01 : f32
    %223 = vector.broadcast %cst_71 : f32 to vector<8x128xf32>
    %224 = arith.mulf %223, %222 : vector<8x128xf32>
    %cst_72 = arith.constant 5.000000e-01 : f32
    %225 = vector.broadcast %cst_72 : f32 to vector<8x128xf32>
    %226 = arith.addf %224, %225 : vector<8x128xf32>
    %227 = vector.extract_strided_slice %220 {offsets = [0, 128], sizes = [8, 128], strides = [1, 1]} : vector<8x256xf32> to vector<8x128xf32>
    %228 = math.tanh %227 : vector<8x128xf32>
    %229 = arith.mulf %228, %5 : vector<8x128xf32>
    %230 = arith.addf %229, %8 : vector<8x128xf32>
    %231 = arith.mulf %226, %230 : vector<8x128xf32>
    %232 = vector.extract_strided_slice %231 {offsets = [0, 64], sizes = [8, 64], strides = [1, 1]} : vector<8x128xf32> to vector<8x64xf32>
    %233 = vector.extract_strided_slice %226 {offsets = [0, 0], sizes = [8, 64], strides = [1, 1]} : vector<8x128xf32> to vector<8x64xf32>
    %234 = arith.mulf %233, %191 : vector<8x64xf32>
    %235 = arith.addf %234, %232 : vector<8x64xf32>
    %236 = vector.extract_strided_slice %230 {offsets = [0, 0], sizes = [8, 64], strides = [1, 1]} : vector<8x128xf32> to vector<8x64xf32>
    %237 = math.tanh %235 : vector<8x64xf32>
    %238 = arith.mulf %236, %237 : vector<8x64xf32>
    %c32 = arith.constant 32 : index
    %c0_73 = arith.constant 0 : index
    %239 = vector.load %arg13[%c32, %c0_73] : memref<56x256xf32, #tpu.memory_space<vmem>>, vector<8x256xf32>
    %c0_74 = arith.constant 0 : index
    %c0_75 = arith.constant 0 : index
    %240 = vector.load %arg3[%c0_74, %c0_75] : memref<64x256xf32, #tpu.memory_space<vmem>>, vector<64x256xf32>
    %cst_76 = arith.constant dense<0.000000e+00> : vector<8x256xf32>
    %241 = tpu.matmul %216, %240, %cst_76 {dimension_numbers = #tpu.dot_dimension_numbers<[1], [0], [0], [1], [0, 0, 1, 1], [], []>} : vector<8x64xf32>, vector<64x256xf32>, vector<8x256xf32> -> vector<8x256xf32>
    %242 = arith.addf %239, %241 : vector<8x256xf32>
    %243 = vector.extract_strided_slice %242 {offsets = [0, 0], sizes = [8, 128], strides = [1, 1]} : vector<8x256xf32> to vector<8x128xf32>
    %244 = math.tanh %243 : vector<8x128xf32>
    %cst_77 = arith.constant 5.000000e-01 : f32
    %245 = vector.broadcast %cst_77 : f32 to vector<8x128xf32>
    %246 = arith.mulf %245, %244 : vector<8x128xf32>
    %cst_78 = arith.constant 5.000000e-01 : f32
    %247 = vector.broadcast %cst_78 : f32 to vector<8x128xf32>
    %248 = arith.addf %246, %247 : vector<8x128xf32>
    %249 = vector.extract_strided_slice %242 {offsets = [0, 128], sizes = [8, 128], strides = [1, 1]} : vector<8x256xf32> to vector<8x128xf32>
    %250 = math.tanh %249 : vector<8x128xf32>
    %251 = arith.mulf %250, %5 : vector<8x128xf32>
    %252 = arith.addf %251, %8 : vector<8x128xf32>
    %253 = arith.mulf %248, %252 : vector<8x128xf32>
    %254 = vector.extract_strided_slice %253 {offsets = [0, 64], sizes = [8, 64], strides = [1, 1]} : vector<8x128xf32> to vector<8x64xf32>
    %255 = vector.extract_strided_slice %248 {offsets = [0, 0], sizes = [8, 64], strides = [1, 1]} : vector<8x128xf32> to vector<8x64xf32>
    %256 = arith.mulf %255, %213 : vector<8x64xf32>
    %257 = arith.addf %256, %254 : vector<8x64xf32>
    %258 = vector.extract_strided_slice %252 {offsets = [0, 0], sizes = [8, 64], strides = [1, 1]} : vector<8x128xf32> to vector<8x64xf32>
    %259 = math.tanh %257 : vector<8x64xf32>
    %260 = arith.mulf %258, %259 : vector<8x64xf32>
    %261 = tpu.concatenate %260, %238 in 1 : vector<8x64xf32>, vector<8x64xf32> -> vector<8x128xf32>
    %c0_79 = arith.constant 0 : index
    %c0_80 = arith.constant 0 : index
    %262 = vector.load %arg4[%c0_79, %c0_80] : memref<128x256xf32, #tpu.memory_space<vmem>>, vector<128x256xf32>
    %cst_81 = arith.constant dense<0.000000e+00> : vector<8x256xf32>
    %263 = tpu.matmul %261, %262, %cst_81 {dimension_numbers = #tpu.dot_dimension_numbers<[1], [0], [0], [1], [0, 0, 1, 1], [], []>} : vector<8x128xf32>, vector<128x256xf32>, vector<8x256xf32> -> vector<8x256xf32>
    %264 = arith.addf %263, %9 : vector<8x256xf32>
    %265 = vector.extract_strided_slice %264 {offsets = [0, 0], sizes = [8, 128], strides = [1, 1]} : vector<8x256xf32> to vector<8x128xf32>
    %266 = math.tanh %265 : vector<8x128xf32>
    %cst_82 = arith.constant 5.000000e-01 : f32
    %267 = vector.broadcast %cst_82 : f32 to vector<8x128xf32>
    %268 = arith.mulf %267, %266 : vector<8x128xf32>
    %cst_83 = arith.constant 5.000000e-01 : f32
    %269 = vector.broadcast %cst_83 : f32 to vector<8x128xf32>
    %270 = arith.addf %268, %269 : vector<8x128xf32>
    %271 = vector.extract_strided_slice %264 {offsets = [0, 128], sizes = [8, 128], strides = [1, 1]} : vector<8x256xf32> to vector<8x128xf32>
    %272 = math.tanh %271 : vector<8x128xf32>
    %273 = arith.mulf %272, %5 : vector<8x128xf32>
    %274 = arith.addf %273, %8 : vector<8x128xf32>
    %275 = arith.mulf %270, %274 : vector<8x128xf32>
    %276 = vector.extract_strided_slice %275 {offsets = [0, 64], sizes = [8, 64], strides = [1, 1]} : vector<8x128xf32> to vector<8x64xf32>
    %277 = vector.extract_strided_slice %270 {offsets = [0, 0], sizes = [8, 64], strides = [1, 1]} : vector<8x128xf32> to vector<8x64xf32>
    %278 = arith.mulf %277, %235 : vector<8x64xf32>
    %279 = arith.addf %278, %276 : vector<8x64xf32>
    %280 = vector.extract_strided_slice %274 {offsets = [0, 0], sizes = [8, 64], strides = [1, 1]} : vector<8x128xf32> to vector<8x64xf32>
    %281 = math.tanh %279 : vector<8x64xf32>
    %282 = arith.mulf %280, %281 : vector<8x64xf32>
    %c40 = arith.constant 40 : index
    %c0_84 = arith.constant 0 : index
    %283 = vector.load %arg13[%c40, %c0_84] : memref<56x256xf32, #tpu.memory_space<vmem>>, vector<8x256xf32>
    %c0_85 = arith.constant 0 : index
    %c0_86 = arith.constant 0 : index
    %284 = vector.load %arg3[%c0_85, %c0_86] : memref<64x256xf32, #tpu.memory_space<vmem>>, vector<64x256xf32>
    %cst_87 = arith.constant dense<0.000000e+00> : vector<8x256xf32>
    %285 = tpu.matmul %260, %284, %cst_87 {dimension_numbers = #tpu.dot_dimension_numbers<[1], [0], [0], [1], [0, 0, 1, 1], [], []>} : vector<8x64xf32>, vector<64x256xf32>, vector<8x256xf32> -> vector<8x256xf32>
    %286 = arith.addf %283, %285 : vector<8x256xf32>
    %287 = vector.extract_strided_slice %286 {offsets = [0, 0], sizes = [8, 128], strides = [1, 1]} : vector<8x256xf32> to vector<8x128xf32>
    %288 = math.tanh %287 : vector<8x128xf32>
    %cst_88 = arith.constant 5.000000e-01 : f32
    %289 = vector.broadcast %cst_88 : f32 to vector<8x128xf32>
    %290 = arith.mulf %289, %288 : vector<8x128xf32>
    %cst_89 = arith.constant 5.000000e-01 : f32
    %291 = vector.broadcast %cst_89 : f32 to vector<8x128xf32>
    %292 = arith.addf %290, %291 : vector<8x128xf32>
    %293 = vector.extract_strided_slice %286 {offsets = [0, 128], sizes = [8, 128], strides = [1, 1]} : vector<8x256xf32> to vector<8x128xf32>
    %294 = math.tanh %293 : vector<8x128xf32>
    %295 = arith.mulf %294, %5 : vector<8x128xf32>
    %296 = arith.addf %295, %8 : vector<8x128xf32>
    %297 = arith.mulf %292, %296 : vector<8x128xf32>
    %298 = vector.extract_strided_slice %297 {offsets = [0, 64], sizes = [8, 64], strides = [1, 1]} : vector<8x128xf32> to vector<8x64xf32>
    %299 = vector.extract_strided_slice %292 {offsets = [0, 0], sizes = [8, 64], strides = [1, 1]} : vector<8x128xf32> to vector<8x64xf32>
    %300 = arith.mulf %299, %257 : vector<8x64xf32>
    %301 = arith.addf %300, %298 : vector<8x64xf32>
    %302 = vector.extract_strided_slice %296 {offsets = [0, 0], sizes = [8, 64], strides = [1, 1]} : vector<8x128xf32> to vector<8x64xf32>
    %303 = math.tanh %301 : vector<8x64xf32>
    %304 = arith.mulf %302, %303 : vector<8x64xf32>
    %305 = tpu.concatenate %304, %282 in 1 : vector<8x64xf32>, vector<8x64xf32> -> vector<8x128xf32>
    %c0_90 = arith.constant 0 : index
    %c0_91 = arith.constant 0 : index
    %306 = vector.load %arg4[%c0_90, %c0_91] : memref<128x256xf32, #tpu.memory_space<vmem>>, vector<128x256xf32>
    %cst_92 = arith.constant dense<0.000000e+00> : vector<8x256xf32>
    %307 = tpu.matmul %305, %306, %cst_92 {dimension_numbers = #tpu.dot_dimension_numbers<[1], [0], [0], [1], [0, 0, 1, 1], [], []>} : vector<8x128xf32>, vector<128x256xf32>, vector<8x256xf32> -> vector<8x256xf32>
    %308 = arith.addf %307, %9 : vector<8x256xf32>
    %309 = vector.extract_strided_slice %308 {offsets = [0, 0], sizes = [8, 128], strides = [1, 1]} : vector<8x256xf32> to vector<8x128xf32>
    %310 = math.tanh %309 : vector<8x128xf32>
    %cst_93 = arith.constant 5.000000e-01 : f32
    %311 = vector.broadcast %cst_93 : f32 to vector<8x128xf32>
    %312 = arith.mulf %311, %310 : vector<8x128xf32>
    %cst_94 = arith.constant 5.000000e-01 : f32
    %313 = vector.broadcast %cst_94 : f32 to vector<8x128xf32>
    %314 = arith.addf %312, %313 : vector<8x128xf32>
    %315 = vector.extract_strided_slice %308 {offsets = [0, 128], sizes = [8, 128], strides = [1, 1]} : vector<8x256xf32> to vector<8x128xf32>
    %316 = math.tanh %315 : vector<8x128xf32>
    %317 = arith.mulf %316, %5 : vector<8x128xf32>
    %318 = arith.addf %317, %8 : vector<8x128xf32>
    %319 = arith.mulf %314, %318 : vector<8x128xf32>
    %320 = vector.extract_strided_slice %319 {offsets = [0, 64], sizes = [8, 64], strides = [1, 1]} : vector<8x128xf32> to vector<8x64xf32>
    %321 = vector.extract_strided_slice %314 {offsets = [0, 0], sizes = [8, 64], strides = [1, 1]} : vector<8x128xf32> to vector<8x64xf32>
    %322 = arith.mulf %321, %279 : vector<8x64xf32>
    %323 = arith.addf %322, %320 : vector<8x64xf32>
    %324 = vector.extract_strided_slice %318 {offsets = [0, 0], sizes = [8, 64], strides = [1, 1]} : vector<8x128xf32> to vector<8x64xf32>
    %325 = math.tanh %323 : vector<8x64xf32>
    %326 = arith.mulf %324, %325 : vector<8x64xf32>
    %c48 = arith.constant 48 : index
    %c0_95 = arith.constant 0 : index
    %327 = vector.load %arg13[%c48, %c0_95] : memref<56x256xf32, #tpu.memory_space<vmem>>, vector<8x256xf32>
    %c0_96 = arith.constant 0 : index
    %c0_97 = arith.constant 0 : index
    %328 = vector.load %arg3[%c0_96, %c0_97] : memref<64x256xf32, #tpu.memory_space<vmem>>, vector<64x256xf32>
    %cst_98 = arith.constant dense<0.000000e+00> : vector<8x256xf32>
    %329 = tpu.matmul %304, %328, %cst_98 {dimension_numbers = #tpu.dot_dimension_numbers<[1], [0], [0], [1], [0, 0, 1, 1], [], []>} : vector<8x64xf32>, vector<64x256xf32>, vector<8x256xf32> -> vector<8x256xf32>
    %330 = arith.addf %327, %329 : vector<8x256xf32>
    %331 = vector.extract_strided_slice %330 {offsets = [0, 0], sizes = [8, 128], strides = [1, 1]} : vector<8x256xf32> to vector<8x128xf32>
    %332 = math.tanh %331 : vector<8x128xf32>
    %cst_99 = arith.constant 5.000000e-01 : f32
    %333 = vector.broadcast %cst_99 : f32 to vector<8x128xf32>
    %334 = arith.mulf %333, %332 : vector<8x128xf32>
    %cst_100 = arith.constant 5.000000e-01 : f32
    %335 = vector.broadcast %cst_100 : f32 to vector<8x128xf32>
    %336 = arith.addf %334, %335 : vector<8x128xf32>
    %337 = vector.extract_strided_slice %330 {offsets = [0, 128], sizes = [8, 128], strides = [1, 1]} : vector<8x256xf32> to vector<8x128xf32>
    %338 = math.tanh %337 : vector<8x128xf32>
    %339 = arith.mulf %338, %5 : vector<8x128xf32>
    %340 = arith.addf %339, %8 : vector<8x128xf32>
    %341 = arith.mulf %336, %340 : vector<8x128xf32>
    %342 = vector.extract_strided_slice %341 {offsets = [0, 64], sizes = [8, 64], strides = [1, 1]} : vector<8x128xf32> to vector<8x64xf32>
    %343 = vector.extract_strided_slice %336 {offsets = [0, 0], sizes = [8, 64], strides = [1, 1]} : vector<8x128xf32> to vector<8x64xf32>
    %344 = arith.mulf %343, %301 : vector<8x64xf32>
    %345 = arith.addf %344, %342 : vector<8x64xf32>
    %346 = vector.extract_strided_slice %340 {offsets = [0, 0], sizes = [8, 64], strides = [1, 1]} : vector<8x128xf32> to vector<8x64xf32>
    %347 = math.tanh %345 : vector<8x64xf32>
    %348 = arith.mulf %346, %347 : vector<8x64xf32>
    %349 = tpu.concatenate %348, %326 in 1 : vector<8x64xf32>, vector<8x64xf32> -> vector<8x128xf32>
    %c0_101 = arith.constant 0 : index
    %c0_102 = arith.constant 0 : index
    %350 = vector.load %arg4[%c0_101, %c0_102] : memref<128x256xf32, #tpu.memory_space<vmem>>, vector<128x256xf32>
    %cst_103 = arith.constant dense<0.000000e+00> : vector<8x256xf32>
    %351 = tpu.matmul %349, %350, %cst_103 {dimension_numbers = #tpu.dot_dimension_numbers<[1], [0], [0], [1], [0, 0, 1, 1], [], []>} : vector<8x128xf32>, vector<128x256xf32>, vector<8x256xf32> -> vector<8x256xf32>
    %352 = arith.addf %351, %9 : vector<8x256xf32>
    %353 = vector.extract_strided_slice %352 {offsets = [0, 0], sizes = [8, 128], strides = [1, 1]} : vector<8x256xf32> to vector<8x128xf32>
    %354 = math.tanh %353 : vector<8x128xf32>
    %cst_104 = arith.constant 5.000000e-01 : f32
    %355 = vector.broadcast %cst_104 : f32 to vector<8x128xf32>
    %356 = arith.mulf %355, %354 : vector<8x128xf32>
    %cst_105 = arith.constant 5.000000e-01 : f32
    %357 = vector.broadcast %cst_105 : f32 to vector<8x128xf32>
    %358 = arith.addf %356, %357 : vector<8x128xf32>
    %359 = vector.extract_strided_slice %352 {offsets = [0, 128], sizes = [8, 128], strides = [1, 1]} : vector<8x256xf32> to vector<8x128xf32>
    %360 = math.tanh %359 : vector<8x128xf32>
    %361 = arith.mulf %360, %5 : vector<8x128xf32>
    %362 = arith.addf %361, %8 : vector<8x128xf32>
    %363 = arith.mulf %358, %362 : vector<8x128xf32>
    %364 = vector.extract_strided_slice %363 {offsets = [0, 64], sizes = [8, 64], strides = [1, 1]} : vector<8x128xf32> to vector<8x64xf32>
    %365 = vector.extract_strided_slice %358 {offsets = [0, 0], sizes = [8, 64], strides = [1, 1]} : vector<8x128xf32> to vector<8x64xf32>
    %366 = arith.mulf %365, %323 : vector<8x64xf32>
    %367 = arith.addf %366, %364 : vector<8x64xf32>
    %368 = vector.extract_strided_slice %362 {offsets = [0, 0], sizes = [8, 64], strides = [1, 1]} : vector<8x128xf32> to vector<8x64xf32>
    %369 = math.tanh %367 : vector<8x64xf32>
    %370 = arith.mulf %368, %369 : vector<8x64xf32>
    %c0_106 = arith.constant 0 : index
    %c0_107 = arith.constant 0 : index
    %371 = vector.load %arg6[%c0_106, %c0_107] : memref<64x64xf32, #tpu.memory_space<vmem>>, vector<64x64xf32>
    %cst_108 = arith.constant dense<0.000000e+00> : vector<8x64xf32>
    %372 = tpu.matmul %370, %371, %cst_108 {dimension_numbers = #tpu.dot_dimension_numbers<[1], [0], [0], [1], [0, 0, 1, 1], [], []>} : vector<8x64xf32>, vector<64x64xf32>, vector<8x64xf32> -> vector<8x64xf32>
    %c0_109 = arith.constant 0 : index
    %c0_110 = arith.constant 0 : index
    %373 = vector.load %arg7[%c0_109, %c0_110] : memref<1x64xf32, #tpu.memory_space<vmem>>, vector<1x64xf32>
    %374 = vector.broadcast %373 : vector<1x64xf32> to vector<8x64xf32>
    %375 = arith.addf %372, %374 : vector<8x64xf32>
    %cst_111 = arith.constant 0.000000e+00 : f32
    %376 = vector.broadcast %cst_111 : f32 to vector<8x64xf32>
    %377 = arith.cmpf ogt, %375, %376 : vector<8x64xf32>
    %cst_112 = arith.constant 0.00999999977 : f32
    %378 = vector.broadcast %cst_112 : f32 to vector<8x64xf32>
    %379 = arith.mulf %378, %375 : vector<8x64xf32>
    %380 = arith.select %377, %375, %379 : vector<8x64xi1>, vector<8x64xf32>
    %c0_113 = arith.constant 0 : index
    %c0_114 = arith.constant 0 : index
    %381 = vector.load %arg8[%c0_113, %c0_114] : memref<64x64xf32, #tpu.memory_space<vmem>>, vector<64x64xf32>
    %cst_115 = arith.constant dense<0.000000e+00> : vector<8x64xf32>
    %382 = tpu.matmul %380, %381, %cst_115 {dimension_numbers = #tpu.dot_dimension_numbers<[1], [0], [0], [1], [0, 0, 1, 1], [], []>} : vector<8x64xf32>, vector<64x64xf32>, vector<8x64xf32> -> vector<8x64xf32>
    %c0_116 = arith.constant 0 : index
    %c0_117 = arith.constant 0 : index
    %383 = vector.load %arg9[%c0_116, %c0_117] : memref<1x64xf32, #tpu.memory_space<vmem>>, vector<1x64xf32>
    %384 = vector.broadcast %383 : vector<1x64xf32> to vector<8x64xf32>
    %385 = arith.addf %382, %384 : vector<8x64xf32>
    %cst_118 = arith.constant 0.000000e+00 : f32
    %386 = vector.broadcast %cst_118 : f32 to vector<8x64xf32>
    %387 = arith.cmpf ogt, %385, %386 : vector<8x64xf32>
    %cst_119 = arith.constant 0.00999999977 : f32
    %388 = vector.broadcast %cst_119 : f32 to vector<8x64xf32>
    %389 = arith.mulf %388, %385 : vector<8x64xf32>
    %390 = arith.select %387, %385, %389 : vector<8x64xi1>, vector<8x64xf32>
    %391 = arith.addf %390, %370 : vector<8x64xf32>
    %c0_120 = arith.constant 0 : index
    %c0_121 = arith.constant 0 : index
    %392 = vector.load %arg10[%c0_120, %c0_121] : memref<1x64xf32, #tpu.memory_space<vmem>>, vector<1x64xf32>
    %393 = vector.broadcast %392 : vector<1x64xf32> to vector<8x64xf32>
    %394 = arith.mulf %391, %393 : vector<8x64xf32>
    %cst_122 = arith.constant dense<0.000000e+00> : vector<8xf32>
    %395 = vector.multi_reduction <add>, %394, %cst_122 [1] : vector<8x64xf32> to vector<8xf32>
    %396 = vector.shape_cast %395 : vector<8xf32> to vector<8x1xf32>
    %c0_123 = arith.constant 0 : index
    %c0_124 = arith.constant 0 : index
    %397 = vector.load %arg11[%c0_123, %c0_124] : memref<1x1xf32, #tpu.memory_space<vmem>>, vector<1x1xf32>
    %398 = vector.broadcast %397 : vector<1x1xf32> to vector<8x1xf32>
    %399 = arith.addf %396, %398 : vector<8x1xf32>
    %cst_125 = arith.constant 0.000000e+00 : f32
    %400 = vector.broadcast %cst_125 : f32 to vector<8x1xf32>
    %401 = arith.cmpf ogt, %399, %400 : vector<8x1xf32>
    %cst_126 = arith.constant 0.00999999977 : f32
    %402 = vector.broadcast %cst_126 : f32 to vector<8x1xf32>
    %403 = arith.mulf %402, %399 : vector<8x1xf32>
    %404 = arith.select %401, %399, %403 : vector<8x1xi1>, vector<8x1xf32>
    %c0_127 = arith.constant 0 : index
    %c0_128 = arith.constant 0 : index
    %405 = vector.load %arg12[%c0_127, %c0_128] : memref<8x1xf32, #tpu.memory_space<vmem>>, vector<8x1xf32>
    tpu.vector_store %arg12[%c0_127, %c0_128], %404 {strides = array<i32>} : memref<8x1xf32, #tpu.memory_space<vmem>>, vector<8x1xf32>,
    return
  }
}

</mosaic_0001>

<llo_original>
// kernel: tpu_custom_call.1
$region0: #{tpu_custom_call.1}
  #allocation0 [shape = 'u32[]', space=smem, size = 0x4, offset = 0x4, fixed_abs, tag = 'smem constant byte address 0x4 - core index']
  #allocation1 [shape = 'u32[144,128]{1,0:T(1,128)}', space=vmem, size = 0x12000, scoped, tag = 'internal scratch']
  #allocation2 [shape = 'f32[56,256]{1,0:T(8,128)}', space=vmem, size = 0xe000, scoped, tag = 'scratch operand']
  #allocation3 [shape = 'f32[1,1]{1,0:T(1,128)S(1)}', space=vmem, size = 0x200, scoped, tag = 'scoped memory for tpu_custom_call.1']
  %s0 = inlined_call_operand.vmem [shape: f32[64,16], index: 0, kind: input, shape index: {}]
  %s1 = inlined_call_operand.vmem [shape: f32[16,256], index: 1, kind: input, shape index: {}]
  %s2 = inlined_call_operand.vmem [shape: f32[1,256], index: 2, kind: input, shape index: {}]
  %s3 = inlined_call_operand.hbm [shape: f32[64,256], index: 3, kind: input, shape index: {}]
  %s4 = inlined_call_operand.hbm [shape: f32[128,256], index: 4, kind: input, shape index: {}]
  %s5 = inlined_call_operand.hbm [shape: f32[8,256], index: 5, kind: input, shape index: {}]
  %s6 = inlined_call_operand.vmem [shape: f32[64,64], index: 6, kind: input, shape index: {}]
  %s7 = inlined_call_operand.vmem [shape: f32[1,64], index: 7, kind: input, shape index: {}]
  %s8 = inlined_call_operand.hbm [shape: f32[64,64], index: 8, kind: input, shape index: {}]
  %s9 = inlined_call_operand.vmem [shape: f32[1,64], index: 9, kind: input, shape index: {}]
  %s10 = inlined_call_operand.vmem [shape: f32[1,64], index: 10, kind: input, shape index: {}]
  %s11 = inlined_call_operand.<no memory space> [shape: f32[1,1], index: 11, kind: input, shape index: {}]
  %s12 = inlined_call_operand.vmem [shape: f32[8,1], index: 12, kind: output, shape index: {}]
  %s13 = sld [smem:[#allocation0]]
  $region74: #{tpu_custom_call.1} parent=0
    _
  %s15 = ssub.s32 1, %s13
  %s16 = scalar_select 0, %s15, %s13
  %v17 = vstv %s11
  %18 = vst [vmem:[#allocation3] sm:$0x1] %v17
  $region1: #{tpu_custom_call.1} parent=0
    #allocation4 [shape = 'u8[65536]{0}', space=vmem, size = 0x10000, scoped, tag = 'input window, operand 3, single buffered']
    #allocation5 [shape = 's32[1]{0}', space=sflag, size = 0x4, scoped, tag = 'scoped memory for tpu_custom_call.1']
    #allocation6 [shape = 'u8[131072]{0}', space=vmem, size = 0x20000, scoped, tag = 'input window, operand 4, single buffered']
    #allocation7 [shape = 's32[1]{0}', space=sflag, size = 0x4, scoped, tag = 'scoped memory for tpu_custom_call.1']
    #allocation8 [shape = 'u8[8192]{0}', space=vmem, size = 0x2000, scoped, tag = 'input window, operand 5, single buffered']
    #allocation9 [shape = 'u8[32768]{0}', space=vmem, size = 0x8000, scoped, tag = 'input window, operand 8, single buffered']
    #allocation10 [shape = 's32[1]{0}', space=sflag, size = 0x4, scoped, tag = 'scoped memory for tpu_custom_call.1']
    %19 = vsyncpa [#allocation5], 0
    %20 = vsyncpa [#allocation7], 0
    %21 = vsyncpa [#allocation10], 0
    // Predicated region
    $region2: #{tpu_custom_call.1} parent=1 // pred_check
      _
    $region3: #{tpu_custom_call.1} parent=1 // pred_check_branch
      %23 = sbr.rel (0) target = $region5
    $region4: #{tpu_custom_call.1} parent=1 // pred_region
      _
    $region5: #{tpu_custom_call.1} parent=1 // pred_fallthru
      _
    // Predicated region
    $region6: #{tpu_custom_call.1} parent=1 // pred_check
      _
    $region7: #{tpu_custom_call.1} parent=1 // pred_check_branch
      %25 = sbr.rel (0) target = $region9
    $region8: #{tpu_custom_call.1} parent=1 // pred_region
      _
    $region9: #{tpu_custom_call.1} parent=1 // pred_fallthru
      _
    // Predicated region
    $region10: #{tpu_custom_call.1} parent=1 // pred_check
      _
    $region11: #{tpu_custom_call.1} parent=1 // pred_check_branch
      %27 = sbr.rel (0) target = $region13
    $region12: #{tpu_custom_call.1} parent=1 // pred_region
      _
    $region13: #{tpu_custom_call.1} parent=1 // pred_fallthru
      _
    // Predicated region
    $region14: #{tpu_custom_call.1} parent=1 // pred_check
      _
    $region15: #{tpu_custom_call.1} parent=1 // pred_check_branch
      %29 = sbr.rel (0) target = $region17
    $region16: #{tpu_custom_call.1} parent=1 // pred_region
      %s31 = ssub.s32 2048, 2048
      %32 = vsyncadd [#allocation5], %s31
      %s33 = sshll.u32 [#allocation4], 4
      %s34 = int_to_ptr.vmem [resolvable:$true] %s33
      %39 = dma.hbm_to_vmem [thread:$0]  %s3, 2048, %s34, [#allocation5], 256, 256, 16
    $region17: #{tpu_custom_call.1} parent=1 // pred_fallthru
      _
    // Predicated region
    $region18: #{tpu_custom_call.1} parent=1 // pred_check
      _
    $region19: #{tpu_custom_call.1} parent=1 // pred_check_branch
      %41 = sbr.rel (0) target = $region21
    $region20: #{tpu_custom_call.1} parent=1 // pred_region
      %s43 = ssub.s32 4096, 4096
      %44 = vsyncadd [#allocation7], %s43
      %s45 = sshll.u32 [#allocation6], 4
      %s46 = int_to_ptr.vmem [resolvable:$true] %s45
      %51 = dma.hbm_to_vmem [thread:$0]  %s4, 4096, %s46, [#allocation7], 256, 256, 16
    $region21: #{tpu_custom_call.1} parent=1 // pred_fallthru
      _
    // Predicated region
    $region22: #{tpu_custom_call.1} parent=1 // pred_check
      _
    $region23: #{tpu_custom_call.1} parent=1 // pred_check_branch
      %53 = sbr.rel (0) target = $region25
    $region24: #{tpu_custom_call.1} parent=1 // pred_region
      %s55 = ssub.s32 256, 256
      %56 = vsyncadd [#allocation7], %s55
      %s58 = sshll.u32 [#allocation8], 4
      %s59 = int_to_ptr.vmem [resolvable:$true] %s58
      %61 = dma.hbm_to_vmem [thread:$0]  %s5, 256, %s59, [#allocation7]
    $region25: #{tpu_custom_call.1} parent=1 // pred_fallthru
      _
    // Predicated region
    $region26: #{tpu_custom_call.1} parent=1 // pred_check
      _
    $region27: #{tpu_custom_call.1} parent=1 // pred_check_branch
      %63 = sbr.rel (0) target = $region29
    $region28: #{tpu_custom_call.1} parent=1 // pred_region
      _
    $region29: #{tpu_custom_call.1} parent=1 // pred_fallthru
      _
    // Predicated region
    $region30: #{tpu_custom_call.1} parent=1 // pred_check
      _
    $region31: #{tpu_custom_call.1} parent=1 // pred_check_branch
      %65 = sbr.rel (0) target = $region33
    $region32: #{tpu_custom_call.1} parent=1 // pred_region
      _
    $region33: #{tpu_custom_call.1} parent=1 // pred_fallthru
      _
    // Predicated region
    $region34: #{tpu_custom_call.1} parent=1 // pred_check
      _
    $region35: #{tpu_custom_call.1} parent=1 // pred_check_branch
      %67 = sbr.rel (0) target = $region37
    $region36: #{tpu_custom_call.1} parent=1 // pred_region
      %s69 = ssub.s32 1024, 1024
      %70 = vsyncadd [#allocation10], %s69
      %s71 = sshll.u32 [#allocation9], 4
      %s72 = int_to_ptr.vmem [resolvable:$true] %s71
      %77 = dma.hbm_to_vmem [thread:$0]  %s8, 1024, %s72, [#allocation10], 128, 128, 8
    $region37: #{tpu_custom_call.1} parent=1 // pred_fallthru
      _
    // Predicated region
    $region38: #{tpu_custom_call.1} parent=1 // pred_check
      _
    $region39: #{tpu_custom_call.1} parent=1 // pred_check_branch
      %79 = sbr.rel (0) target = $region41
    $region40: #{tpu_custom_call.1} parent=1 // pred_region
      _
    $region41: #{tpu_custom_call.1} parent=1 // pred_fallthru
      _
    // Predicated region
    $region42: #{tpu_custom_call.1} parent=1 // pred_check
      _
    $region43: #{tpu_custom_call.1} parent=1 // pred_check_branch
      %81 = sbr.rel (0) target = $region45
    $region44: #{tpu_custom_call.1} parent=1 // pred_region
      _
    $region45: #{tpu_custom_call.1} parent=1 // pred_fallthru
      _
    // Predicated region
    $region46: #{tpu_custom_call.1} parent=1 // pred_check
      _
    $region47: #{tpu_custom_call.1} parent=1 // pred_check_branch
      %83 = sbr.rel (0) target = $region49
    $region48: #{tpu_custom_call.1} parent=1 // pred_region
      _
    $region49: #{tpu_custom_call.1} parent=1 // pred_fallthru
      _
    // Predicated region
    $region50: #{tpu_custom_call.1} parent=1 // pred_check
      _
    $region51: #{tpu_custom_call.1} parent=1 // pred_check_branch
      %85 = sbr.rel (0) target = $region53
    $region52: #{tpu_custom_call.1} parent=1 // pred_region
      %86 = dma.done [#allocation5], 2048
    $region53: #{tpu_custom_call.1} parent=1 // pred_fallthru
      _
    // Predicated region
    $region54: #{tpu_custom_call.1} parent=1 // pred_check
      _
    $region55: #{tpu_custom_call.1} parent=1 // pred_check_branch
      %88 = sbr.rel (0) target = $region57
    $region56: #{tpu_custom_call.1} parent=1 // pred_region
      %89 = dma.done [#allocation7], 4096
    $region57: #{tpu_custom_call.1} parent=1 // pred_fallthru
      _
    // Predicated region
    $region58: #{tpu_custom_call.1} parent=1 // pred_check
      _
    $region59: #{tpu_custom_call.1} parent=1 // pred_check_branch
      %91 = sbr.rel (0) target = $region61
    $region60: #{tpu_custom_call.1} parent=1 // pred_region
      %92 = dma.done [#allocation7], 256
    $region61: #{tpu_custom_call.1} parent=1 // pred_fallthru
      _
    // Predicated region
    $region62: #{tpu_custom_call.1} parent=1 // pred_check
      _
    $region63: #{tpu_custom_call.1} parent=1 // pred_check_branch
      %94 = sbr.rel (0) target = $region65
    $region64: #{tpu_custom_call.1} parent=1 // pred_region
      %95 = dma.done [#allocation10], 1024
    $region65: #{tpu_custom_call.1} parent=1 // pred_fallthru
      _
    %v96 = vlaneseq
    %v97 = vand.u32 %v96, 127
    %vm98 = vcmp.lt.s32.totalorder %v97, 64
    %v99 = vsel %vm98, 0.5, 1.0
    %v100 = vsel %vm98, 0.5, 0.0
    %v101 = vld [vmem:[#allocation8] sm:$0xff]
    %v102 = vld [vmem:[#allocation8 + $0x8] sm:$0xff]
    %v103 = vld [vmem:[%s0] sm:$0xff]
    %v104 = vld [vmem:[%s1] sm:$0xff]
    %v105 = vld [vmem:[%s1 + $0x8] sm:$0xff]
    %v106 = vld [vmem:[%s1 + $0x10] sm:$0xff]
    %v107 = vld [vmem:[%s1 + $0x18] sm:$0xff]
    %v108 = vld [vmem:[%s2] sm:$0x3]
    %v110 = vlaneseq
    %v111 = vshrl.u32 %v110, 7
    %v112 = vsub.s32 0, %v111
    %v113 = vrot.slane %v108, %v112
    %v114 = vlaneseq
    %v115 = vshrl.u32 %v114, 7
    %v116 = vsub.s32 1, %v115
    %v117 = vrot.slane %v108, %v116
    %vm120 = vcmask 130048
    %v122 = vsel %vm120, %v103, 0
    %124 = vmatprep.subr.mxu0 %v105
    %125 = vmatpush1.msra.mxu0 %v104
    %126 = vmatprep.subr.mxu0 %v107
    %127 = vmatpush1.msra.mxu0 %v106
    %128 = vmatprep.subr.mxu0 0.0
    %129 = vmatpush1.msra.mxu0 0.0
    %130 = vmatprep.subr.mxu0 0.0
    %131 = vmatpush1.msra.mxu0 0.0
    %132 = vmatprep.subr.mxu0 0.0
    %133 = vmatpush1.msra.mxu0 0.0
    %134 = vmatprep.subr.mxu0 0.0
    %135 = vmatpush1.msra.mxu0 0.0
    %136 = vmatprep.subr.mxu0 0.0
    %137 = vmatpush1.msra.mxu0 0.0
    %138 = vmatprep.subr.mxu0 0.0
    %139 = vmatpush1.msra.mxu0 0.0
    %140 = vmatprep.subr.mxu0 0.0
    %141 = vmatpush1.msra.mxu0 0.0
    %142 = vmatprep.subr.mxu0 0.0
    %143 = vmatpush1.msra.mxu0 0.0
    %144 = vmatprep.subr.mxu0 0.0
    %145 = vmatpush1.msra.mxu0 0.0
    %146 = vmatprep.subr.mxu0 0.0
    %147 = vmatpush1.msra.mxu0 0.0
    %148 = vmatprep.subr.mxu0 0.0
    %149 = vmatpush1.msra.mxu0 0.0
    %150 = vmatprep.subr.mxu0 0.0
    %151 = vmatpush1.msra.mxu0 0.0
    %152 = vmatprep.subr.mxu0 0.0
    %153 = vmatpush1.msra.mxu0 0.0
    %154 = vmatprep.subr.mxu0 0.0
    %155 = vmatpush1.msra.mxu0 0.0
    %156 = vmatprep.subr.mxu0 0.0
    %157 = vmatpush1.msra.mxu0 0.0
    %158 = vmatprep.subr.mxu0 0.0
    %159 = vmatpush1.msra.mxu0 0.0
    %160 = vmatprep.subr.mxu0 0.0
    %161 = vmatpush1.msra.mxu0 0.0
    %162 = vmatprep.subr.mxu0 0.0
    %163 = vmatpush1.msra.mxu0 0.0
    %164 = vmatprep.subr.mxu0 0.0
    %165 = vmatpush1.msra.mxu0 0.0
    %166 = vmatprep.subr.mxu0 0.0
    %167 = vmatpush1.msra.mxu0 0.0
    %168 = vmatprep.subr.mxu0 0.0
    %169 = vmatpush1.msra.mxu0 0.0
    %170 = vmatprep.subr.mxu0 0.0
    %171 = vmatpush1.msra.mxu0 0.0
    %172 = vmatprep.subr.mxu0 0.0
    %173 = vmatpush1.msra.mxu0 0.0
    %174 = vmatprep.subr.mxu0 0.0
    %175 = vmatpush1.msra.mxu0 0.0
    %176 = vmatprep.subr.mxu0 0.0
    %177 = vmatpush1.msra.mxu0 0.0
    %178 = vmatprep.subr.mxu0 0.0
    %179 = vmatpush1.msra.mxu0 0.0
    %180 = vmatprep.subr.mxu0 0.0
    %181 = vmatpush1.msra.mxu0 0.0
    %182 = vmatprep.subr.mxu0 0.0
    %183 = vmatpush1.msra.mxu0 0.0
    %184 = vmatprep.subr.mxu0 0.0
    %185 = vmatpush1.msra.mxu0 0.0
    %186 = vmatprep.subr.mxu0 0.0
    %187 = vmatpush1.msra.mxu0 0.0
    %188 = vmatprep.mubr.f32.mxu0 0.0
    %189 = vmatmul.mubr.f32.gmra.mrb[0].mxu0 %v122
    %v190 = vpop.f32.mrb[0].mxu0
    %v191 = vadd.f32 %v113, %v190
    %v192 = vpop.f32.mrb[0].mxu0
    %v193 = vadd.f32 %v117, %v192
    %194 = vdwg.mxu0
    %v195 = vtanh.pop %v191
    %v196 = vmul.f32 %v195, 0.5
    %v197 = vadd.f32 %v196, 0.5
    %v198 = vtanh.pop %v193
    %v199 = vmul.f32 %v198, %v99
    %v200 = vadd.f32 %v199, %v100
    %v201 = vmul.f32 %v197, %v200
    %v202 = vmul.f32 %v197, 0.0
    %204 = vrot.lane.b32.xlu0 %v201, 64
    %v205 = vpop.permute.xlu0 %204
    %v207 = vadd.f32 %v202, %v205
    %v208 = vtanh.pop %v207
    %v209 = vmul.f32 %v200, %v208
    %v210 = vld [vmem:[%s0 + $0x8] sm:$0xff]
    %v211 = vld [vmem:[%s0 + $0x10] sm:$0xff]
    %v212 = vld [vmem:[%s0 + $0x18] sm:$0xff]
    %v213 = vld [vmem:[%s0 + $0x20] sm:$0xff]
    %v214 = vld [vmem:[%s0 + $0x28] sm:$0xff]
    %v215 = vld [vmem:[%s0 + $0x30] sm:$0xff]
    %v216 = vld [vmem:[%s0 + $0x38] sm:$0xff]
    %v218 = vsel %vm120, %v210, 0
    %v221 = vsel %vm120, %v211, 0
    %v224 = vsel %vm120, %v212, 0
    %v227 = vsel %vm120, %v213, 0
    %v230 = vsel %vm120, %v214, 0
    %v233 = vsel %vm120, %v215, 0
    %v236 = vsel %vm120, %v216, 0
    %238 = vmatprep.subr.mxu0 %v105
    %239 = vmatpush1.msra.mxu0 %v104
    %240 = vmatprep.subr.mxu0 %v107
    %241 = vmatpush1.msra.mxu0 %v106
    %242 = vmatprep.subr.mxu0 0.0
    %243 = vmatpush1.msra.mxu0 0.0
    %244 = vmatprep.subr.mxu0 0.0
    %245 = vmatpush1.msra.mxu0 0.0
    %246 = vmatprep.subr.mxu0 0.0
    %247 = vmatpush1.msra.mxu0 0.0
    %248 = vmatprep.subr.mxu0 0.0
    %249 = vmatpush1.msra.mxu0 0.0
    %250 = vmatprep.subr.mxu0 0.0
    %251 = vmatpush1.msra.mxu0 0.0
    %252 = vmatprep.subr.mxu0 0.0
    %253 = vmatpush1.msra.mxu0 0.0
    %254 = vmatprep.subr.mxu0 0.0
    %255 = vmatpush1.msra.mxu0 0.0
    %256 = vmatprep.subr.mxu0 0.0
    %257 = vmatpush1.msra.mxu0 0.0
    %258 = vmatprep.subr.mxu0 0.0
    %259 = vmatpush1.msra.mxu0 0.0
    %260 = vmatprep.subr.mxu0 0.0
    %261 = vmatpush1.msra.mxu0 0.0
    %262 = vmatprep.subr.mxu0 0.0
    %263 = vmatpush1.msra.mxu0 0.0
    %264 = vmatprep.subr.mxu0 0.0
    %265 = vmatpush1.msra.mxu0 0.0
    %266 = vmatprep.subr.mxu0 0.0
    %267 = vmatpush1.msra.mxu0 0.0
    %268 = vmatprep.subr.mxu0 0.0
    %269 = vmatpush1.msra.mxu0 0.0
    %270 = vmatprep.subr.mxu0 0.0
    %271 = vmatpush1.msra.mxu0 0.0
    %272 = vmatprep.subr.mxu0 0.0
    %273 = vmatpush1.msra.mxu0 0.0
    %274 = vmatprep.subr.mxu0 0.0
    %275 = vmatpush1.msra.mxu0 0.0
    %276 = vmatprep.subr.mxu0 0.0
    %277 = vmatpush1.msra.mxu0 0.0
    %278 = vmatprep.subr.mxu0 0.0
    %279 = vmatpush1.msra.mxu0 0.0
    %280 = vmatprep.subr.mxu0 0.0
    %281 = vmatpush1.msra.mxu0 0.0
    %282 = vmatprep.subr.mxu0 0.0
    %283 = vmatpush1.msra.mxu0 0.0
    %284 = vmatprep.subr.mxu0 0.0
    %285 = vmatpush1.msra.mxu0 0.0
    %286 = vmatprep.subr.mxu0 0.0
    %287 = vmatpush1.msra.mxu0 0.0
    %288 = vmatprep.subr.mxu0 0.0
    %289 = vmatpush1.msra.mxu0 0.0
    %290 = vmatprep.subr.mxu0 0.0
    %291 = vmatpush1.msra.mxu0 0.0
    %292 = vmatprep.subr.mxu0 0.0
    %293 = vmatpush1.msra.mxu0 0.0
    %294 = vmatprep.subr.mxu0 0.0
    %295 = vmatpush1.msra.mxu0 0.0
    %296 = vmatprep.subr.mxu0 0.0
    %297 = vmatpush1.msra.mxu0 0.0
    %298 = vmatprep.subr.mxu0 0.0
    %299 = vmatpush1.msra.mxu0 0.0
    %300 = vmatprep.subr.mxu0 0.0
    %301 = vmatpush1.msra.mxu0 0.0
    %302 = vmatprep.mubr.f32.mxu0 0.0
    %303 = vmatmul.mubr.f32.gmra.mrb[0].mxu0 %v218
    %v304 = vpop.f32.mrb[0].mxu0
    %v305 = vadd.f32 %v113, %v304
    %v306 = vpop.f32.mrb[0].mxu0
    %v307 = vadd.f32 %v117, %v306
    %308 = vmatprep.mubr.f32.mxu0 0.0
    %309 = vmatmul.mubr.f32.gmra.mrb[0].mxu0 %v221
    %v310 = vpop.f32.mrb[0].mxu0
    %v311 = vadd.f32 %v113, %v310
    %v312 = vpop.f32.mrb[0].mxu0
    %v313 = vadd.f32 %v117, %v312
    %314 = vmatprep.mubr.f32.mxu0 0.0
    %315 = vmatmul.mubr.f32.gmra.mrb[0].mxu0 %v224
    %v316 = vpop.f32.mrb[0].mxu0
    %v317 = vadd.f32 %v113, %v316
    %v318 = vpop.f32.mrb[0].mxu0
    %v319 = vadd.f32 %v117, %v318
    %320 = vmatprep.mubr.f32.mxu0 0.0
    %321 = vmatmul.mubr.f32.gmra.mrb[0].mxu0 %v227
    %v322 = vpop.f32.mrb[0].mxu0
    %v323 = vadd.f32 %v113, %v322
    %v324 = vpop.f32.mrb[0].mxu0
    %v325 = vadd.f32 %v117, %v324
    %326 = vmatprep.mubr.f32.mxu0 0.0
    %327 = vmatmul.mubr.f32.gmra.mrb[0].mxu0 %v230
    %v328 = vpop.f32.mrb[0].mxu0
    %v329 = vadd.f32 %v113, %v328
    %v330 = vpop.f32.mrb[0].mxu0
    %v331 = vadd.f32 %v117, %v330
    %332 = vmatprep.mubr.f32.mxu0 0.0
    %333 = vmatmul.mubr.f32.gmra.mrb[0].mxu0 %v233
    %v334 = vpop.f32.mrb[0].mxu0
    %v335 = vadd.f32 %v113, %v334
    %v336 = vpop.f32.mrb[0].mxu0
    %v337 = vadd.f32 %v117, %v336
    %338 = vmatprep.mubr.f32.mxu0 0.0
    %339 = vmatmul.mubr.f32.gmra.mrb[0].mxu0 %v236
    %v340 = vpop.f32.mrb[0].mxu0
    %v341 = vadd.f32 %v113, %v340
    %v342 = vpop.f32.mrb[0].mxu0
    %v343 = vadd.f32 %v117, %v342
    %344 = vdwg.mxu0
    %345 = vst [vmem:[#allocation2] sm:$0xff] %v305
    %346 = vst [vmem:[#allocation2 + $0x8] sm:$0xff] %v307
    %347 = vst [vmem:[#allocation2 + $0x10] sm:$0xff] %v311
    %348 = vst [vmem:[#allocation2 + $0x18] sm:$0xff] %v313
    %349 = vst [vmem:[#allocation2 + $0x20] sm:$0xff] %v317
    %350 = vst [vmem:[#allocation2 + $0x28] sm:$0xff] %v319
    %351 = vst [vmem:[#allocation2 + $0x30] sm:$0xff] %v323
    %352 = vst [vmem:[#allocation2 + $0x38] sm:$0xff] %v325
    %353 = vst [vmem:[#allocation2 + $0x40] sm:$0xff] %v329
    %354 = vst [vmem:[#allocation2 + $0x48] sm:$0xff] %v331
    %355 = vst [vmem:[#allocation2 + $0x50] sm:$0xff] %v335
    %356 = vst [vmem:[#allocation2 + $0x58] sm:$0xff] %v337
    %357 = vst [vmem:[#allocation2 + $0x60] sm:$0xff] %v341
    %358 = vst [vmem:[#allocation2 + $0x68] sm:$0xff] %v343
    %v359 = vld [vmem:[#allocation6] sm:$0xff]
    %v360 = vld [vmem:[#allocation6 + $0x8] sm:$0xff]
    %v361 = vld [vmem:[#allocation6 + $0x10] sm:$0xff]
    %v362 = vld [vmem:[#allocation6 + $0x18] sm:$0xff]
    %v363 = vld [vmem:[#allocation6 + $0x20] sm:$0xff]
    %v364 = vld [vmem:[#allocation6 + $0x28] sm:$0xff]
    %v365 = vld [vmem:[#allocation6 + $0x30] sm:$0xff]
    %v366 = vld [vmem:[#allocation6 + $0x38] sm:$0xff]
    %v367 = vld [vmem:[#allocation6 + $0x40] sm:$0xff]
    %v368 = vld [vmem:[#allocation6 + $0x48] sm:$0xff]
    %v369 = vld [vmem:[#allocation6 + $0x50] sm:$0xff]
    %v370 = vld [vmem:[#allocation6 + $0x58] sm:$0xff]
    %v371 = vld [vmem:[#allocation6 + $0x60] sm:$0xff]
    %v372 = vld [vmem:[#allocation6 + $0x68] sm:$0xff]
    %v373 = vld [vmem:[#allocation6 + $0x70] sm:$0xff]
    %v374 = vld [vmem:[#allocation6 + $0x78] sm:$0xff]
    %vm375 = vcmask 523264
    %v377 = vsel %vm375, %v209, 0
    %379 = vmatprep.subr.mxu0 %v360
    %380 = vmatpush1.msra.mxu0 %v359
    %381 = vmatprep.subr.mxu0 %v362
    %382 = vmatpush1.msra.mxu0 %v361
    %383 = vmatprep.subr.mxu0 %v364
    %384 = vmatpush1.msra.mxu0 %v363
    %385 = vmatprep.subr.mxu0 %v366
    %386 = vmatpush1.msra.mxu0 %v365
    %387 = vmatprep.subr.mxu0 %v368
    %388 = vmatpush1.msra.mxu0 %v367
    %389 = vmatprep.subr.mxu0 %v370
    %390 = vmatpush1.msra.mxu0 %v369
    %391 = vmatprep.subr.mxu0 %v372
    %392 = vmatpush1.msra.mxu0 %v371
    %393 = vmatprep.subr.mxu0 %v374
    %394 = vmatpush1.msra.mxu0 %v373
    %395 = vmatprep.subr.mxu0 0.0
    %396 = vmatpush1.msra.mxu0 0.0
    %397 = vmatprep.subr.mxu0 0.0
    %398 = vmatpush1.msra.mxu0 0.0
    %399 = vmatprep.subr.mxu0 0.0
    %400 = vmatpush1.msra.mxu0 0.0
    %401 = vmatprep.subr.mxu0 0.0
    %402 = vmatpush1.msra.mxu0 0.0
    %403 = vmatprep.subr.mxu0 0.0
    %404 = vmatpush1.msra.mxu0 0.0
    %405 = vmatprep.subr.mxu0 0.0
    %406 = vmatpush1.msra.mxu0 0.0
    %407 = vmatprep.subr.mxu0 0.0
    %408 = vmatpush1.msra.mxu0 0.0
    %409 = vmatprep.subr.mxu0 0.0
    %410 = vmatpush1.msra.mxu0 0.0
    %411 = vmatprep.subr.mxu0 0.0
    %412 = vmatpush1.msra.mxu0 0.0
    %413 = vmatprep.subr.mxu0 0.0
    %414 = vmatpush1.msra.mxu0 0.0
    %415 = vmatprep.subr.mxu0 0.0
    %416 = vmatpush1.msra.mxu0 0.0
    %417 = vmatprep.subr.mxu0 0.0
    %418 = vmatpush1.msra.mxu0 0.0
    %419 = vmatprep.subr.mxu0 0.0
    %420 = vmatpush1.msra.mxu0 0.0
    %421 = vmatprep.subr.mxu0 0.0
    %422 = vmatpush1.msra.mxu0 0.0
    %423 = vmatprep.subr.mxu0 0.0
    %424 = vmatpush1.msra.mxu0 0.0
    %425 = vmatprep.subr.mxu0 0.0
    %426 = vmatpush1.msra.mxu0 0.0
    %427 = vmatprep.subr.mxu0 0.0
    %428 = vmatpush1.msra.mxu0 0.0
    %429 = vmatprep.subr.mxu0 0.0
    %430 = vmatpush1.msra.mxu0 0.0
    %431 = vmatprep.subr.mxu0 0.0
    %432 = vmatpush1.msra.mxu0 0.0
    %433 = vmatprep.subr.mxu0 0.0
    %434 = vmatpush1.msra.mxu0 0.0
    %435 = vmatprep.subr.mxu0 0.0
    %436 = vmatpush1.msra.mxu0 0.0
    %437 = vmatprep.subr.mxu0 0.0
    %438 = vmatpush1.msra.mxu0 0.0
    %439 = vmatprep.subr.mxu0 0.0
    %440 = vmatpush1.msra.mxu0 0.0
    %441 = vmatprep.subr.mxu0 0.0
    %442 = vmatpush1.msra.mxu0 0.0
    %443 = vmatprep.mubr.f32.mxu0 0.0
    %444 = vmatmul.mubr.f32.gmra.mrb[0].mxu0 %v377
    %v445 = vpop.f32.mrb[0].mxu0
    %v446 = vadd.f32 %v101, %v445
    %v447 = vpop.f32.mrb[0].mxu0
    %v448 = vadd.f32 %v102, %v447
    %449 = vdwg.mxu0
    %v450 = vtanh.pop %v446
    %v451 = vmul.f32 %v450, 0.5
    %v452 = vadd.f32 %v451, 0.5
    %v453 = vtanh.pop %v448
    %v454 = vmul.f32 %v453, %v99
    %v455 = vadd.f32 %v454, %v100
    %v456 = vmul.f32 %v452, %v455
    %v457 = vmul.f32 %v452, 0.0
    %459 = vrot.lane.b32.xlu0 %v456, 64
    %v460 = vpop.permute.xlu0 %459
    %v462 = vadd.f32 %v457, %v460
    %v463 = vtanh.pop %v462
    %v464 = vmul.f32 %v455, %v463
    %v465 = vld [vmem:[#allocation2] sm:$0xff]
    %v466 = vld [vmem:[#allocation2 + $0x8] sm:$0xff]
    %v467 = vld [vmem:[#allocation4] sm:$0xff]
    %v468 = vld [vmem:[#allocation4 + $0x8] sm:$0xff]
    %v469 = vld [vmem:[#allocation4 + $0x10] sm:$0xff]
    %v470 = vld [vmem:[#allocation4 + $0x18] sm:$0xff]
    %v471 = vld [vmem:[#allocation4 + $0x20] sm:$0xff]
    %v472 = vld [vmem:[#allocation4 + $0x28] sm:$0xff]
    %v473 = vld [vmem:[#allocation4 + $0x30] sm:$0xff]
    %v474 = vld [vmem:[#allocation4 + $0x38] sm:$0xff]
    %v475 = vld [vmem:[#allocation4 + $0x40] sm:$0xff]
    %v476 = vld [vmem:[#allocation4 + $0x48] sm:$0xff]
    %v477 = vld [vmem:[#allocation4 + $0x50] sm:$0xff]
    %v478 = vld [vmem:[#allocation4 + $0x58] sm:$0xff]
    %v479 = vld [vmem:[#allocation4 + $0x60] sm:$0xff]
    %v480 = vld [vmem:[#allocation4 + $0x68] sm:$0xff]
    %v481 = vld [vmem:[#allocation4 + $0x70] sm:$0xff]
    %v482 = vld [vmem:[#allocation4 + $0x78] sm:$0xff]
    %483 = vmatprep.subr.mxu0 %v468
    %484 = vmatpush1.msra.mxu0 %v467
    %485 = vmatprep.subr.mxu0 %v470
    %486 = vmatpush1.msra.mxu0 %v469
    %487 = vmatprep.subr.mxu0 %v472
    %488 = vmatpush1.msra.mxu0 %v471
    %489 = vmatprep.subr.mxu0 %v474
    %490 = vmatpush1.msra.mxu0 %v473
    %491 = vmatprep.subr.mxu0 %v476
    %492 = vmatpush1.msra.mxu0 %v475
    %493 = vmatprep.subr.mxu0 %v478
    %494 = vmatpush1.msra.mxu0 %v477
    %495 = vmatprep.subr.mxu0 %v480
    %496 = vmatpush1.msra.mxu0 %v479
    %497 = vmatprep.subr.mxu0 %v482
    %498 = vmatpush1.msra.mxu0 %v481
    %499 = vmatprep.subr.mxu0 0.0
    %500 = vmatpush1.msra.mxu0 0.0
    %501 = vmatprep.subr.mxu0 0.0
    %502 = vmatpush1.msra.mxu0 0.0
    %503 = vmatprep.subr.mxu0 0.0
    %504 = vmatpush1.msra.mxu0 0.0
    %505 = vmatprep.subr.mxu0 0.0
    %506 = vmatpush1.msra.mxu0 0.0
    %507 = vmatprep.subr.mxu0 0.0
    %508 = vmatpush1.msra.mxu0 0.0
    %509 = vmatprep.subr.mxu0 0.0
    %510 = vmatpush1.msra.mxu0 0.0
    %511 = vmatprep.subr.mxu0 0.0
    %512 = vmatpush1.msra.mxu0 0.0
    %513 = vmatprep.subr.mxu0 0.0
    %514 = vmatpush1.msra.mxu0 0.0
    %515 = vmatprep.subr.mxu0 0.0
    %516 = vmatpush1.msra.mxu0 0.0
    %517 = vmatprep.subr.mxu0 0.0
    %518 = vmatpush1.msra.mxu0 0.0
    %519 = vmatprep.subr.mxu0 0.0
    %520 = vmatpush1.msra.mxu0 0.0
    %521 = vmatprep.subr.mxu0 0.0
    %522 = vmatpush1.msra.mxu0 0.0
    %523 = vmatprep.subr.mxu0 0.0
    %524 = vmatpush1.msra.mxu0 0.0
    %525 = vmatprep.subr.mxu0 0.0
    %526 = vmatpush1.msra.mxu0 0.0
    %527 = vmatprep.subr.mxu0 0.0
    %528 = vmatpush1.msra.mxu0 0.0
    %529 = vmatprep.subr.mxu0 0.0
    %530 = vmatpush1.msra.mxu0 0.0
    %531 = vmatprep.subr.mxu0 0.0
    %532 = vmatpush1.msra.mxu0 0.0
    %533 = vmatprep.subr.mxu0 0.0
    %534 = vmatpush1.msra.mxu0 0.0
    %535 = vmatprep.subr.mxu0 0.0
    %536 = vmatpush1.msra.mxu0 0.0
    %537 = vmatprep.subr.mxu0 0.0
    %538 = vmatpush1.msra.mxu0 0.0
    %539 = vmatprep.subr.mxu0 0.0
    %540 = vmatpush1.msra.mxu0 0.0
    %541 = vmatprep.subr.mxu0 0.0
    %542 = vmatpush1.msra.mxu0 0.0
    %543 = vmatprep.subr.mxu0 0.0
    %544 = vmatpush1.msra.mxu0 0.0
    %545 = vmatprep.subr.mxu0 0.0
    %546 = vmatpush1.msra.mxu0 0.0
    %547 = vmatprep.mubr.f32.mxu0 0.0
    %548 = vmatmul.mubr.f32.gmra.mrb[0].mxu0 %v377
    %v549 = vpop.f32.mrb[0].mxu0
    %v550 = vadd.f32 0.0, %v549
    %v551 = vpop.f32.mrb[0].mxu0
    %v552 = vadd.f32 0.0, %v551
    %553 = vdwg.mxu0
    %v554 = vadd.f32 %v465, %v550
    %v555 = vadd.f32 %v466, %v552
    %v556 = vtanh.pop %v554
    %v557 = vmul.f32 %v556, 0.5
    %v558 = vadd.f32 %v557, 0.5
    %v559 = vtanh.pop %v555
    %v560 = vmul.f32 %v559, %v99
    %v561 = vadd.f32 %v560, %v100
    %v562 = vmul.f32 %v558, %v561
    %v563 = vmul.f32 %v558, %v207
    %565 = vrot.lane.b32.xlu0 %v562, 64
    %v566 = vpop.permute.xlu0 %565
    %v568 = vadd.f32 %v563, %v566
    %v569 = vtanh.pop %v568
    %v570 = vmul.f32 %v561, %v569
    %572 = vrot.lane.b32.xlu0 %v464, 64
    %v573 = vpop.permute.xlu0 %572
    %v575 = vsel %vm375, %v570, %v573
    %v576 = vld [vmem:[#allocation6] sm:$0xff]
    %v577 = vld [vmem:[#allocation6 + $0x8] sm:$0xff]
    %v578 = vld [vmem:[#allocation6 + $0x10] sm:$0xff]
    %v579 = vld [vmem:[#allocation6 + $0x18] sm:$0xff]
    %v580 = vld [vmem:[#allocation6 + $0x20] sm:$0xff]
    %v581 = vld [vmem:[#allocation6 + $0x28] sm:$0xff]
    %v582 = vld [vmem:[#allocation6 + $0x30] sm:$0xff]
    %v583 = vld [vmem:[#allocation6 + $0x38] sm:$0xff]
    %v584 = vld [vmem:[#allocation6 + $0x40] sm:$0xff]
    %v585 = vld [vmem:[#allocation6 + $0x48] sm:$0xff]
    %v586 = vld [vmem:[#allocation6 + $0x50] sm:$0xff]
    %v587 = vld [vmem:[#allocation6 + $0x58] sm:$0xff]
    %v588 = vld [vmem:[#allocation6 + $0x60] sm:$0xff]
    %v589 = vld [vmem:[#allocation6 + $0x68] sm:$0xff]
    %v590 = vld [vmem:[#allocation6 + $0x70] sm:$0xff]
    %v591 = vld [vmem:[#allocation6 + $0x78] sm:$0xff]
    %v592 = vld [vmem:[#allocation6 + $0x80] sm:$0xff]
    %v593 = vld [vmem:[#allocation6 + $0x88] sm:$0xff]
    %v594 = vld [vmem:[#allocation6 + $0x90] sm:$0xff]
    %v595 = vld [vmem:[#allocation6 + $0x98] sm:$0xff]
    %v596 = vld [vmem:[#allocation6 + $0xa0] sm:$0xff]
    %v597 = vld [vmem:[#allocation6 + $0xa8] sm:$0xff]
    %v598 = vld [vmem:[#allocation6 + $0xb0] sm:$0xff]
    %v599 = vld [vmem:[#allocation6 + $0xb8] sm:$0xff]
    %v600 = vld [vmem:[#allocation6 + $0xc0] sm:$0xff]
    %v601 = vld [vmem:[#allocation6 + $0xc8] sm:$0xff]
    %v602 = vld [vmem:[#allocation6 + $0xd0] sm:$0xff]
    %v603 = vld [vmem:[#allocation6 + $0xd8] sm:$0xff]
    %v604 = vld [vmem:[#allocation6 + $0xe0] sm:$0xff]
    %v605 = vld [vmem:[#allocation6 + $0xe8] sm:$0xff]
    %v606 = vld [vmem:[#allocation6 + $0xf0] sm:$0xff]
    %v607 = vld [vmem:[#allocation6 + $0xf8] sm:$0xff]
    %608 = vmatprep.subr.mxu0 %v577
    %609 = vmatpush1.msra.mxu0 %v576
    %610 = vmatprep.subr.mxu0 %v579
    %611 = vmatpush1.msra.mxu0 %v578
    %612 = vmatprep.subr.mxu0 %v581
    %613 = vmatpush1.msra.mxu0 %v580
    %614 = vmatprep.subr.mxu0 %v583
    %615 = vmatpush1.msra.mxu0 %v582
    %616 = vmatprep.subr.mxu0 %v585
    %617 = vmatpush1.msra.mxu0 %v584
    %618 = vmatprep.subr.mxu0 %v587
    %619 = vmatpush1.msra.mxu0 %v586
    %620 = vmatprep.subr.mxu0 %v589
    %621 = vmatpush1.msra.mxu0 %v588
    %622 = vmatprep.subr.mxu0 %v591
    %623 = vmatpush1.msra.mxu0 %v590
    %624 = vmatprep.subr.mxu0 %v593
    %625 = vmatpush1.msra.mxu0 %v592
    %626 = vmatprep.subr.mxu0 %v595
    %627 = vmatpush1.msra.mxu0 %v594
    %628 = vmatprep.subr.mxu0 %v597
    %629 = vmatpush1.msra.mxu0 %v596
    %630 = vmatprep.subr.mxu0 %v599
    %631 = vmatpush1.msra.mxu0 %v598
    %632 = vmatprep.subr.mxu0 %v601
    %633 = vmatpush1.msra.mxu0 %v600
    %634 = vmatprep.subr.mxu0 %v603
    %635 = vmatpush1.msra.mxu0 %v602
    %636 = vmatprep.subr.mxu0 %v605
    %637 = vmatpush1.msra.mxu0 %v604
    %638 = vmatprep.subr.mxu0 %v607
    %639 = vmatpush1.msra.mxu0 %v606
    %640 = vmatprep.subr.mxu0 0.0
    %641 = vmatpush1.msra.mxu0 0.0
    %642 = vmatprep.subr.mxu0 0.0
    %643 = vmatpush1.msra.mxu0 0.0
    %644 = vmatprep.subr.mxu0 0.0
    %645 = vmatpush1.msra.mxu0 0.0
    %646 = vmatprep.subr.mxu0 0.0
    %647 = vmatpush1.msra.mxu0 0.0
    %648 = vmatprep.subr.mxu0 0.0
    %649 = vmatpush1.msra.mxu0 0.0
    %650 = vmatprep.subr.mxu0 0.0
    %651 = vmatpush1.msra.mxu0 0.0
    %652 = vmatprep.subr.mxu0 0.0
    %653 = vmatpush1.msra.mxu0 0.0
    %654 = vmatprep.subr.mxu0 0.0
    %655 = vmatpush1.msra.mxu0 0.0
    %656 = vmatprep.subr.mxu0 0.0
    %657 = vmatpush1.msra.mxu0 0.0
    %658 = vmatprep.subr.mxu0 0.0
    %659 = vmatpush1.msra.mxu0 0.0
    %660 = vmatprep.subr.mxu0 0.0
    %661 = vmatpush1.msra.mxu0 0.0
    %662 = vmatprep.subr.mxu0 0.0
    %663 = vmatpush1.msra.mxu0 0.0
    %664 = vmatprep.subr.mxu0 0.0
    %665 = vmatpush1.msra.mxu0 0.0
    %666 = vmatprep.subr.mxu0 0.0
    %667 = vmatpush1.msra.mxu0 0.0
    %668 = vmatprep.subr.mxu0 0.0
    %669 = vmatpush1.msra.mxu0 0.0
    %670 = vmatprep.subr.mxu0 0.0
    %671 = vmatpush1.msra.mxu0 0.0
    %672 = vmatprep.mubr.f32.mxu0 0.0
    %673 = vmatmul.mubr.f32.gmra.mrb[0].mxu0 %v575
    %v674 = vpop.f32.mrb[0].mxu0
    %v675 = vadd.f32 %v101, %v674
    %v676 = vpop.f32.mrb[0].mxu0
    %v677 = vadd.f32 %v102, %v676
    %678 = vdwg.mxu0
    %v679 = vtanh.pop %v675
    %v680 = vmul.f32 %v679, 0.5
    %v681 = vadd.f32 %v680, 0.5
    %v682 = vtanh.pop %v677
    %v683 = vmul.f32 %v682, %v99
    %v684 = vadd.f32 %v683, %v100
    %v685 = vmul.f32 %v681, %v684
    %v686 = vmul.f32 %v681, %v462
    %688 = vrot.lane.b32.xlu0 %v685, 64
    %v689 = vpop.permute.xlu0 %688
    %v691 = vadd.f32 %v686, %v689
    %v692 = vtanh.pop %v691
    %v693 = vmul.f32 %v684, %v692
    %v694 = vld [vmem:[#allocation2 + $0x10] sm:$0xff]
    %v695 = vld [vmem:[#allocation2 + $0x18] sm:$0xff]
    %v697 = vsel %vm375, %v570, 0
    %699 = vmatprep.subr.mxu0 %v468
    %700 = vmatpush1.msra.mxu0 %v467
    %701 = vmatprep.subr.mxu0 %v470
    %702 = vmatpush1.msra.mxu0 %v469
    %703 = vmatprep.subr.mxu0 %v472
    %704 = vmatpush1.msra.mxu0 %v471
    %705 = vmatprep.subr.mxu0 %v474
    %706 = vmatpush1.msra.mxu0 %v473
    %707 = vmatprep.subr.mxu0 %v476
    %708 = vmatpush1.msra.mxu0 %v475
    %709 = vmatprep.subr.mxu0 %v478
    %710 = vmatpush1.msra.mxu0 %v477
    %711 = vmatprep.subr.mxu0 %v480
    %712 = vmatpush1.msra.mxu0 %v479
    %713 = vmatprep.subr.mxu0 %v482
    %714 = vmatpush1.msra.mxu0 %v481
    %715 = vmatprep.subr.mxu0 0.0
    %716 = vmatpush1.msra.mxu0 0.0
    %717 = vmatprep.subr.mxu0 0.0
    %718 = vmatpush1.msra.mxu0 0.0
    %719 = vmatprep.subr.mxu0 0.0
    %720 = vmatpush1.msra.mxu0 0.0
    %721 = vmatprep.subr.mxu0 0.0
    %722 = vmatpush1.msra.mxu0 0.0
    %723 = vmatprep.subr.mxu0 0.0
    %724 = vmatpush1.msra.mxu0 0.0
    %725 = vmatprep.subr.mxu0 0.0
    %726 = vmatpush1.msra.mxu0 0.0
    %727 = vmatprep.subr.mxu0 0.0
    %728 = vmatpush1.msra.mxu0 0.0
    %729 = vmatprep.subr.mxu0 0.0
    %730 = vmatpush1.msra.mxu0 0.0
    %731 = vmatprep.subr.mxu0 0.0
    %732 = vmatpush1.msra.mxu0 0.0
    %733 = vmatprep.subr.mxu0 0.0
    %734 = vmatpush1.msra.mxu0 0.0
    %735 = vmatprep.subr.mxu0 0.0
    %736 = vmatpush1.msra.mxu0 0.0
    %737 = vmatprep.subr.mxu0 0.0
    %738 = vmatpush1.msra.mxu0 0.0
    %739 = vmatprep.subr.mxu0 0.0
    %740 = vmatpush1.msra.mxu0 0.0
    %741 = vmatprep.subr.mxu0 0.0
    %742 = vmatpush1.msra.mxu0 0.0
    %743 = vmatprep.subr.mxu0 0.0
    %744 = vmatpush1.msra.mxu0 0.0
    %745 = vmatprep.subr.mxu0 0.0
    %746 = vmatpush1.msra.mxu0 0.0
    %747 = vmatprep.subr.mxu0 0.0
    %748 = vmatpush1.msra.mxu0 0.0
    %749 = vmatprep.subr.mxu0 0.0
    %750 = vmatpush1.msra.mxu0 0.0
    %751 = vmatprep.subr.mxu0 0.0
    %752 = vmatpush1.msra.mxu0 0.0
    %753 = vmatprep.subr.mxu0 0.0
    %754 = vmatpush1.msra.mxu0 0.0
    %755 = vmatprep.subr.mxu0 0.0
    %756 = vmatpush1.msra.mxu0 0.0
    %757 = vmatprep.subr.mxu0 0.0
    %758 = vmatpush1.msra.mxu0 0.0
    %759 = vmatprep.subr.mxu0 0.0
    %760 = vmatpush1.msra.mxu0 0.0
    %761 = vmatprep.subr.mxu0 0.0
    %762 = vmatpush1.msra.mxu0 0.0
    %763 = vmatprep.mubr.f32.mxu0 0.0
    %764 = vmatmul.mubr.f32.gmra.mrb[0].mxu0 %v697
    %v765 = vpop.f32.mrb[0].mxu0
    %v766 = vadd.f32 0.0, %v765
    %v767 = vpop.f32.mrb[0].mxu0
    %v768 = vadd.f32 0.0, %v767
    %769 = vdwg.mxu0
    %v770 = vadd.f32 %v694, %v766
    %v771 = vadd.f32 %v695, %v768
    %v772 = vtanh.pop %v770
    %v773 = vmul.f32 %v772, 0.5
    %v774 = vadd.f32 %v773, 0.5
    %v775 = vtanh.pop %v771
    %v776 = vmul.f32 %v775, %v99
    %v777 = vadd.f32 %v776, %v100
    %v778 = vmul.f32 %v774, %v777
    %v779 = vmul.f32 %v774, %v568
    %781 = vrot.lane.b32.xlu0 %v778, 64
    %v782 = vpop.permute.xlu0 %781
    %v784 = vadd.f32 %v779, %v782
    %v785 = vtanh.pop %v784
    %v786 = vmul.f32 %v777, %v785
    %788 = vrot.lane.b32.xlu0 %v693, 64
    %v789 = vpop.permute.xlu0 %788
    %v791 = vsel %vm375, %v786, %v789
    %792 = vmatprep.subr.mxu0 %v577
    %793 = vmatpush1.msra.mxu0 %v576
    %794 = vmatprep.subr.mxu0 %v579
    %795 = vmatpush1.msra.mxu0 %v578
    %796 = vmatprep.subr.mxu0 %v581
    %797 = vmatpush1.msra.mxu0 %v580
    %798 = vmatprep.subr.mxu0 %v583
    %799 = vmatpush1.msra.mxu0 %v582
    %800 = vmatprep.subr.mxu0 %v585
    %801 = vmatpush1.msra.mxu0 %v584
    %802 = vmatprep.subr.mxu0 %v587
    %803 = vmatpush1.msra.mxu0 %v586
    %804 = vmatprep.subr.mxu0 %v589
    %805 = vmatpush1.msra.mxu0 %v588
    %806 = vmatprep.subr.mxu0 %v591
    %807 = vmatpush1.msra.mxu0 %v590
    %808 = vmatprep.subr.mxu0 %v593
    %809 = vmatpush1.msra.mxu0 %v592
    %810 = vmatprep.subr.mxu0 %v595
    %811 = vmatpush1.msra.mxu0 %v594
    %812 = vmatprep.subr.mxu0 %v597
    %813 = vmatpush1.msra.mxu0 %v596
    %814 = vmatprep.subr.mxu0 %v599
    %815 = vmatpush1.msra.mxu0 %v598
    %816 = vmatprep.subr.mxu0 %v601
    %817 = vmatpush1.msra.mxu0 %v600
    %818 = vmatprep.subr.mxu0 %v603
    %819 = vmatpush1.msra.mxu0 %v602
    %820 = vmatprep.subr.mxu0 %v605
    %821 = vmatpush1.msra.mxu0 %v604
    %822 = vmatprep.subr.mxu0 %v607
    %823 = vmatpush1.msra.mxu0 %v606
    %824 = vmatprep.subr.mxu0 0.0
    %825 = vmatpush1.msra.mxu0 0.0
    %826 = vmatprep.subr.mxu0 0.0
    %827 = vmatpush1.msra.mxu0 0.0
    %828 = vmatprep.subr.mxu0 0.0
    %829 = vmatpush1.msra.mxu0 0.0
    %830 = vmatprep.subr.mxu0 0.0
    %831 = vmatpush1.msra.mxu0 0.0
    %832 = vmatprep.subr.mxu0 0.0
    %833 = vmatpush1.msra.mxu0 0.0
    %834 = vmatprep.subr.mxu0 0.0
    %835 = vmatpush1.msra.mxu0 0.0
    %836 = vmatprep.subr.mxu0 0.0
    %837 = vmatpush1.msra.mxu0 0.0
    %838 = vmatprep.subr.mxu0 0.0
    %839 = vmatpush1.msra.mxu0 0.0
    %840 = vmatprep.subr.mxu0 0.0
    %841 = vmatpush1.msra.mxu0 0.0
    %842 = vmatprep.subr.mxu0 0.0
    %843 = vmatpush1.msra.mxu0 0.0
    %844 = vmatprep.subr.mxu0 0.0
    %845 = vmatpush1.msra.mxu0 0.0
    %846 = vmatprep.subr.mxu0 0.0
    %847 = vmatpush1.msra.mxu0 0.0
    %848 = vmatprep.subr.mxu0 0.0
    %849 = vmatpush1.msra.mxu0 0.0
    %850 = vmatprep.subr.mxu0 0.0
    %851 = vmatpush1.msra.mxu0 0.0
    %852 = vmatprep.subr.mxu0 0.0
    %853 = vmatpush1.msra.mxu0 0.0
    %854 = vmatprep.subr.mxu0 0.0
    %855 = vmatpush1.msra.mxu0 0.0
    %856 = vmatprep.mubr.f32.mxu0 0.0
    %857 = vmatmul.mubr.f32.gmra.mrb[0].mxu0 %v791
    %v858 = vpop.f32.mrb[0].mxu0
    %v859 = vadd.f32 %v101, %v858
    %v860 = vpop.f32.mrb[0].mxu0
    %v861 = vadd.f32 %v102, %v860
    %862 = vdwg.mxu0
    %v863 = vtanh.pop %v859
    %v864 = vmul.f32 %v863, 0.5
    %v865 = vadd.f32 %v864, 0.5
    %v866 = vtanh.pop %v861
    %v867 = vmul.f32 %v866, %v99
    %v868 = vadd.f32 %v867, %v100
    %v869 = vmul.f32 %v865, %v868
    %v870 = vmul.f32 %v865, %v691
    %872 = vrot.lane.b32.xlu0 %v869, 64
    %v873 = vpop.permute.xlu0 %872
    %v875 = vadd.f32 %v870, %v873
    %v876 = vtanh.pop %v875
    %v877 = vmul.f32 %v868, %v876
    %v878 = vld [vmem:[#allocation2 + $0x20] sm:$0xff]
    %v879 = vld [vmem:[#allocation2 + $0x28] sm:$0xff]
    %v881 = vsel %vm375, %v786, 0
    %883 = vmatprep.subr.mxu0 %v468
    %884 = vmatpush1.msra.mxu0 %v467
    %885 = vmatprep.subr.mxu0 %v470
    %886 = vmatpush1.msra.mxu0 %v469
    %887 = vmatprep.subr.mxu0 %v472
    %888 = vmatpush1.msra.mxu0 %v471
    %889 = vmatprep.subr.mxu0 %v474
    %890 = vmatpush1.msra.mxu0 %v473
    %891 = vmatprep.subr.mxu0 %v476
    %892 = vmatpush1.msra.mxu0 %v475
    %893 = vmatprep.subr.mxu0 %v478
    %894 = vmatpush1.msra.mxu0 %v477
    %895 = vmatprep.subr.mxu0 %v480
    %896 = vmatpush1.msra.mxu0 %v479
    %897 = vmatprep.subr.mxu0 %v482
    %898 = vmatpush1.msra.mxu0 %v481
    %899 = vmatprep.subr.mxu0 0.0
    %900 = vmatpush1.msra.mxu0 0.0
    %901 = vmatprep.subr.mxu0 0.0
    %902 = vmatpush1.msra.mxu0 0.0
    %903 = vmatprep.subr.mxu0 0.0
    %904 = vmatpush1.msra.mxu0 0.0
    %905 = vmatprep.subr.mxu0 0.0
    %906 = vmatpush1.msra.mxu0 0.0
    %907 = vmatprep.subr.mxu0 0.0
    %908 = vmatpush1.msra.mxu0 0.0
    %909 = vmatprep.subr.mxu0 0.0
    %910 = vmatpush1.msra.mxu0 0.0
    %911 = vmatprep.subr.mxu0 0.0
    %912 = vmatpush1.msra.mxu0 0.0
    %913 = vmatprep.subr.mxu0 0.0
    %914 = vmatpush1.msra.mxu0 0.0
    %915 = vmatprep.subr.mxu0 0.0
    %916 = vmatpush1.msra.mxu0 0.0
    %917 = vmatprep.subr.mxu0 0.0
    %918 = vmatpush1.msra.mxu0 0.0
    %919 = vmatprep.subr.mxu0 0.0
    %920 = vmatpush1.msra.mxu0 0.0
    %921 = vmatprep.subr.mxu0 0.0
    %922 = vmatpush1.msra.mxu0 0.0
    %923 = vmatprep.subr.mxu0 0.0
    %924 = vmatpush1.msra.mxu0 0.0
    %925 = vmatprep.subr.mxu0 0.0
    %926 = vmatpush1.msra.mxu0 0.0
    %927 = vmatprep.subr.mxu0 0.0
    %928 = vmatpush1.msra.mxu0 0.0
    %929 = vmatprep.subr.mxu0 0.0
    %930 = vmatpush1.msra.mxu0 0.0
    %931 = vmatprep.subr.mxu0 0.0
    %932 = vmatpush1.msra.mxu0 0.0
    %933 = vmatprep.subr.mxu0 0.0
    %934 = vmatpush1.msra.mxu0 0.0
    %935 = vmatprep.subr.mxu0 0.0
    %936 = vmatpush1.msra.mxu0 0.0
    %937 = vmatprep.subr.mxu0 0.0
    %938 = vmatpush1.msra.mxu0 0.0
    %939 = vmatprep.subr.mxu0 0.0
    %940 = vmatpush1.msra.mxu0 0.0
    %941 = vmatprep.subr.mxu0 0.0
    %942 = vmatpush1.msra.mxu0 0.0
    %943 = vmatprep.subr.mxu0 0.0
    %944 = vmatpush1.msra.mxu0 0.0
    %945 = vmatprep.subr.mxu0 0.0
    %946 = vmatpush1.msra.mxu0 0.0
    %947 = vmatprep.mubr.f32.mxu0 0.0
    %948 = vmatmul.mubr.f32.gmra.mrb[0].mxu0 %v881
    %v949 = vpop.f32.mrb[0].mxu0
    %v950 = vadd.f32 0.0, %v949
    %v951 = vpop.f32.mrb[0].mxu0
    %v952 = vadd.f32 0.0, %v951
    %953 = vdwg.mxu0
    %v954 = vadd.f32 %v878, %v950
    %v955 = vadd.f32 %v879, %v952
    %v956 = vtanh.pop %v954
    %v957 = vmul.f32 %v956, 0.5
    %v958 = vadd.f32 %v957, 0.5
    %v959 = vtanh.pop %v955
    %v960 = vmul.f32 %v959, %v99
    %v961 = vadd.f32 %v960, %v100
    %v962 = vmul.f32 %v958, %v961
    %v963 = vmul.f32 %v958, %v784
    %965 = vrot.lane.b32.xlu0 %v962, 64
    %v966 = vpop.permute.xlu0 %965
    %v968 = vadd.f32 %v963, %v966
    %v969 = vtanh.pop %v968
    %v970 = vmul.f32 %v961, %v969
    %972 = vrot.lane.b32.xlu0 %v877, 64
    %v973 = vpop.permute.xlu0 %972
    %v975 = vsel %vm375, %v970, %v973
    %976 = vmatprep.subr.mxu0 %v577
    %977 = vmatpush1.msra.mxu0 %v576
    %978 = vmatprep.subr.mxu0 %v579
    %979 = vmatpush1.msra.mxu0 %v578
    %980 = vmatprep.subr.mxu0 %v581
    %981 = vmatpush1.msra.mxu0 %v580
    %982 = vmatprep.subr.mxu0 %v583
    %983 = vmatpush1.msra.mxu0 %v582
    %984 = vmatprep.subr.mxu0 %v585
    %985 = vmatpush1.msra.mxu0 %v584
    %986 = vmatprep.subr.mxu0 %v587
    %987 = vmatpush1.msra.mxu0 %v586
    %988 = vmatprep.subr.mxu0 %v589
    %989 = vmatpush1.msra.mxu0 %v588
    %990 = vmatprep.subr.mxu0 %v591
    %991 = vmatpush1.msra.mxu0 %v590
    %992 = vmatprep.subr.mxu0 %v593
    %993 = vmatpush1.msra.mxu0 %v592
    %994 = vmatprep.subr.mxu0 %v595
    %995 = vmatpush1.msra.mxu0 %v594
    %996 = vmatprep.subr.mxu0 %v597
    %997 = vmatpush1.msra.mxu0 %v596
    %998 = vmatprep.subr.mxu0 %v599
    %999 = vmatpush1.msra.mxu0 %v598
    %1000 = vmatprep.subr.mxu0 %v601
    %1001 = vmatpush1.msra.mxu0 %v600
    %1002 = vmatprep.subr.mxu0 %v603
    %1003 = vmatpush1.msra.mxu0 %v602
    %1004 = vmatprep.subr.mxu0 %v605
    %1005 = vmatpush1.msra.mxu0 %v604
    %1006 = vmatprep.subr.mxu0 %v607
    %1007 = vmatpush1.msra.mxu0 %v606
    %1008 = vmatprep.subr.mxu0 0.0
    %1009 = vmatpush1.msra.mxu0 0.0
    %1010 = vmatprep.subr.mxu0 0.0
    %1011 = vmatpush1.msra.mxu0 0.0
    %1012 = vmatprep.subr.mxu0 0.0
    %1013 = vmatpush1.msra.mxu0 0.0
    %1014 = vmatprep.subr.mxu0 0.0
    %1015 = vmatpush1.msra.mxu0 0.0
    %1016 = vmatprep.subr.mxu0 0.0
    %1017 = vmatpush1.msra.mxu0 0.0
    %1018 = vmatprep.subr.mxu0 0.0
    %1019 = vmatpush1.msra.mxu0 0.0
    %1020 = vmatprep.subr.mxu0 0.0
    %1021 = vmatpush1.msra.mxu0 0.0
    %1022 = vmatprep.subr.mxu0 0.0
    %1023 = vmatpush1.msra.mxu0 0.0
    %1024 = vmatprep.subr.mxu0 0.0
    %1025 = vmatpush1.msra.mxu0 0.0
    %1026 = vmatprep.subr.mxu0 0.0
    %1027 = vmatpush1.msra.mxu0 0.0
    %1028 = vmatprep.subr.mxu0 0.0
    %1029 = vmatpush1.msra.mxu0 0.0
    %1030 = vmatprep.subr.mxu0 0.0
    %1031 = vmatpush1.msra.mxu0 0.0
    %1032 = vmatprep.subr.mxu0 0.0
    %1033 = vmatpush1.msra.mxu0 0.0
    %1034 = vmatprep.subr.mxu0 0.0
    %1035 = vmatpush1.msra.mxu0 0.0
    %1036 = vmatprep.subr.mxu0 0.0
    %1037 = vmatpush1.msra.mxu0 0.0
    %1038 = vmatprep.subr.mxu0 0.0
    %1039 = vmatpush1.msra.mxu0 0.0
    %1040 = vmatprep.mubr.f32.mxu0 0.0
    %1041 = vmatmul.mubr.f32.gmra.mrb[0].mxu0 %v975
    %v1042 = vpop.f32.mrb[0].mxu0
    %v1043 = vadd.f32 %v101, %v1042
    %v1044 = vpop.f32.mrb[0].mxu0
    %v1045 = vadd.f32 %v102, %v1044
    %1046 = vdwg.mxu0
    %v1047 = vtanh.pop %v1043
    %v1048 = vmul.f32 %v1047, 0.5
    %v1049 = vadd.f32 %v1048, 0.5
    %v1050 = vtanh.pop %v1045
    %v1051 = vmul.f32 %v1050, %v99
    %v1052 = vadd.f32 %v1051, %v100
    %v1053 = vmul.f32 %v1049, %v1052
    %v1054 = vmul.f32 %v1049, %v875
    %1056 = vrot.lane.b32.xlu0 %v1053, 64
    %v1057 = vpop.permute.xlu0 %1056
    %v1059 = vadd.f32 %v1054, %v1057
    %v1060 = vtanh.pop %v1059
    %v1061 = vmul.f32 %v1052, %v1060
    %v1062 = vld [vmem:[#allocation2 + $0x30] sm:$0xff]
    %v1063 = vld [vmem:[#allocation2 + $0x38] sm:$0xff]
    %v1065 = vsel %vm375, %v970, 0
    %1067 = vmatprep.subr.mxu0 %v468
    %1068 = vmatpush1.msra.mxu0 %v467
    %1069 = vmatprep.subr.mxu0 %v470
    %1070 = vmatpush1.msra.mxu0 %v469
    %1071 = vmatprep.subr.mxu0 %v472
    %1072 = vmatpush1.msra.mxu0 %v471
    %1073 = vmatprep.subr.mxu0 %v474
    %1074 = vmatpush1.msra.mxu0 %v473
    %1075 = vmatprep.subr.mxu0 %v476
    %1076 = vmatpush1.msra.mxu0 %v475
    %1077 = vmatprep.subr.mxu0 %v478
    %1078 = vmatpush1.msra.mxu0 %v477
    %1079 = vmatprep.subr.mxu0 %v480
    %1080 = vmatpush1.msra.mxu0 %v479
    %1081 = vmatprep.subr.mxu0 %v482
    %1082 = vmatpush1.msra.mxu0 %v481
    %1083 = vmatprep.subr.mxu0 0.0
    %1084 = vmatpush1.msra.mxu0 0.0
    %1085 = vmatprep.subr.mxu0 0.0
    %1086 = vmatpush1.msra.mxu0 0.0
    %1087 = vmatprep.subr.mxu0 0.0
    %1088 = vmatpush1.msra.mxu0 0.0
    %1089 = vmatprep.subr.mxu0 0.0
    %1090 = vmatpush1.msra.mxu0 0.0
    %1091 = vmatprep.subr.mxu0 0.0
    %1092 = vmatpush1.msra.mxu0 0.0
    %1093 = vmatprep.subr.mxu0 0.0
    %1094 = vmatpush1.msra.mxu0 0.0
    %1095 = vmatprep.subr.mxu0 0.0
    %1096 = vmatpush1.msra.mxu0 0.0
    %1097 = vmatprep.subr.mxu0 0.0
    %1098 = vmatpush1.msra.mxu0 0.0
    %1099 = vmatprep.subr.mxu0 0.0
    %1100 = vmatpush1.msra.mxu0 0.0
    %1101 = vmatprep.subr.mxu0 0.0
    %1102 = vmatpush1.msra.mxu0 0.0
    %1103 = vmatprep.subr.mxu0 0.0
    %1104 = vmatpush1.msra.mxu0 0.0
    %1105 = vmatprep.subr.mxu0 0.0
    %1106 = vmatpush1.msra.mxu0 0.0
    %1107 = vmatprep.subr.mxu0 0.0
    %1108 = vmatpush1.msra.mxu0 0.0
    %1109 = vmatprep.subr.mxu0 0.0
    %1110 = vmatpush1.msra.mxu0 0.0
    %1111 = vmatprep.subr.mxu0 0.0
    %1112 = vmatpush1.msra.mxu0 0.0
    %1113 = vmatprep.subr.mxu0 0.0
    %1114 = vmatpush1.msra.mxu0 0.0
    %1115 = vmatprep.subr.mxu0 0.0
    %1116 = vmatpush1.msra.mxu0 0.0
    %1117 = vmatprep.subr.mxu0 0.0
    %1118 = vmatpush1.msra.mxu0 0.0
    %1119 = vmatprep.subr.mxu0 0.0
    %1120 = vmatpush1.msra.mxu0 0.0
    %1121 = vmatprep.subr.mxu0 0.0
    %1122 = vmatpush1.msra.mxu0 0.0
    %1123 = vmatprep.subr.mxu0 0.0
    %1124 = vmatpush1.msra.mxu0 0.0
    %1125 = vmatprep.subr.mxu0 0.0
    %1126 = vmatpush1.msra.mxu0 0.0
    %1127 = vmatprep.subr.mxu0 0.0
    %1128 = vmatpush1.msra.mxu0 0.0
    %1129 = vmatprep.subr.mxu0 0.0
    %1130 = vmatpush1.msra.mxu0 0.0
    %1131 = vmatprep.mubr.f32.mxu0 0.0
    %1132 = vmatmul.mubr.f32.gmra.mrb[0].mxu0 %v1065
    %v1133 = vpop.f32.mrb[0].mxu0
    %v1134 = vadd.f32 0.0, %v1133
    %v1135 = vpop.f32.mrb[0].mxu0
    %v1136 = vadd.f32 0.0, %v1135
    %1137 = vdwg.mxu0
    %v1138 = vadd.f32 %v1062, %v1134
    %v1139 = vadd.f32 %v1063, %v1136
    %v1140 = vtanh.pop %v1138
    %v1141 = vmul.f32 %v1140, 0.5
    %v1142 = vadd.f32 %v1141, 0.5
    %v1143 = vtanh.pop %v1139
    %v1144 = vmul.f32 %v1143, %v99
    %v1145 = vadd.f32 %v1144, %v100
    %v1146 = vmul.f32 %v1142, %v1145
    %v1147 = vmul.f32 %v1142, %v968
    %1149 = vrot.lane.b32.xlu0 %v1146, 64
    %v1150 = vpop.permute.xlu0 %1149
    %v1152 = vadd.f32 %v1147, %v1150
    %v1153 = vtanh.pop %v1152
    %v1154 = vmul.f32 %v1145, %v1153
    %1156 = vrot.lane.b32.xlu0 %v1061, 64
    %v1157 = vpop.permute.xlu0 %1156
    %v1159 = vsel %vm375, %v1154, %v1157
    %1160 = vmatprep.subr.mxu0 %v577
    %1161 = vmatpush1.msra.mxu0 %v576
    %1162 = vmatprep.subr.mxu0 %v579
    %1163 = vmatpush1.msra.mxu0 %v578
    %1164 = vmatprep.subr.mxu0 %v581
    %1165 = vmatpush1.msra.mxu0 %v580
    %1166 = vmatprep.subr.mxu0 %v583
    %1167 = vmatpush1.msra.mxu0 %v582
    %1168 = vmatprep.subr.mxu0 %v585
    %1169 = vmatpush1.msra.mxu0 %v584
    %1170 = vmatprep.subr.mxu0 %v587
    %1171 = vmatpush1.msra.mxu0 %v586
    %1172 = vmatprep.subr.mxu0 %v589
    %1173 = vmatpush1.msra.mxu0 %v588
    %1174 = vmatprep.subr.mxu0 %v591
    %1175 = vmatpush1.msra.mxu0 %v590
    %1176 = vmatprep.subr.mxu0 %v593
    %1177 = vmatpush1.msra.mxu0 %v592
    %1178 = vmatprep.subr.mxu0 %v595
    %1179 = vmatpush1.msra.mxu0 %v594
    %1180 = vmatprep.subr.mxu0 %v597
    %1181 = vmatpush1.msra.mxu0 %v596
    %1182 = vmatprep.subr.mxu0 %v599
    %1183 = vmatpush1.msra.mxu0 %v598
    %1184 = vmatprep.subr.mxu0 %v601
    %1185 = vmatpush1.msra.mxu0 %v600
    %1186 = vmatprep.subr.mxu0 %v603
    %1187 = vmatpush1.msra.mxu0 %v602
    %1188 = vmatprep.subr.mxu0 %v605
    %1189 = vmatpush1.msra.mxu0 %v604
    %1190 = vmatprep.subr.mxu0 %v607
    %1191 = vmatpush1.msra.mxu0 %v606
    %1192 = vmatprep.subr.mxu0 0.0
    %1193 = vmatpush1.msra.mxu0 0.0
    %1194 = vmatprep.subr.mxu0 0.0
    %1195 = vmatpush1.msra.mxu0 0.0
    %1196 = vmatprep.subr.mxu0 0.0
    %1197 = vmatpush1.msra.mxu0 0.0
    %1198 = vmatprep.subr.mxu0 0.0
    %1199 = vmatpush1.msra.mxu0 0.0
    %1200 = vmatprep.subr.mxu0 0.0
    %1201 = vmatpush1.msra.mxu0 0.0
    %1202 = vmatprep.subr.mxu0 0.0
    %1203 = vmatpush1.msra.mxu0 0.0
    %1204 = vmatprep.subr.mxu0 0.0
    %1205 = vmatpush1.msra.mxu0 0.0
    %1206 = vmatprep.subr.mxu0 0.0
    %1207 = vmatpush1.msra.mxu0 0.0
    %1208 = vmatprep.subr.mxu0 0.0
    %1209 = vmatpush1.msra.mxu0 0.0
    %1210 = vmatprep.subr.mxu0 0.0
    %1211 = vmatpush1.msra.mxu0 0.0
    %1212 = vmatprep.subr.mxu0 0.0
    %1213 = vmatpush1.msra.mxu0 0.0
    %1214 = vmatprep.subr.mxu0 0.0
    %1215 = vmatpush1.msra.mxu0 0.0
    %1216 = vmatprep.subr.mxu0 0.0
    %1217 = vmatpush1.msra.mxu0 0.0
    %1218 = vmatprep.subr.mxu0 0.0
    %1219 = vmatpush1.msra.mxu0 0.0
    %1220 = vmatprep.subr.mxu0 0.0
    %1221 = vmatpush1.msra.mxu0 0.0
    %1222 = vmatprep.subr.mxu0 0.0
    %1223 = vmatpush1.msra.mxu0 0.0
    %1224 = vmatprep.mubr.f32.mxu0 0.0
    %1225 = vmatmul.mubr.f32.gmra.mrb[0].mxu0 %v1159
    %v1226 = vpop.f32.mrb[0].mxu0
    %v1227 = vadd.f32 %v101, %v1226
    %v1228 = vpop.f32.mrb[0].mxu0
    %v1229 = vadd.f32 %v102, %v1228
    %1230 = vdwg.mxu0
    %v1231 = vtanh.pop %v1227
    %v1232 = vmul.f32 %v1231, 0.5
    %v1233 = vadd.f32 %v1232, 0.5
    %v1234 = vtanh.pop %v1229
    %v1235 = vmul.f32 %v1234, %v99
    %v1236 = vadd.f32 %v1235, %v100
    %v1237 = vmul.f32 %v1233, %v1236
    %v1238 = vmul.f32 %v1233, %v1059
    %1240 = vrot.lane.b32.xlu0 %v1237, 64
    %v1241 = vpop.permute.xlu0 %1240
    %v1243 = vadd.f32 %v1238, %v1241
    %v1244 = vtanh.pop %v1243
    %v1245 = vmul.f32 %v1236, %v1244
    %v1246 = vld [vmem:[#allocation2 + $0x40] sm:$0xff]
    %v1247 = vld [vmem:[#allocation2 + $0x48] sm:$0xff]
    %v1249 = vsel %vm375, %v1154, 0
    %1251 = vmatprep.subr.mxu0 %v468
    %1252 = vmatpush1.msra.mxu0 %v467
    %1253 = vmatprep.subr.mxu0 %v470
    %1254 = vmatpush1.msra.mxu0 %v469
    %1255 = vmatprep.subr.mxu0 %v472
    %1256 = vmatpush1.msra.mxu0 %v471
    %1257 = vmatprep.subr.mxu0 %v474
    %1258 = vmatpush1.msra.mxu0 %v473
    %1259 = vmatprep.subr.mxu0 %v476
    %1260 = vmatpush1.msra.mxu0 %v475
    %1261 = vmatprep.subr.mxu0 %v478
    %1262 = vmatpush1.msra.mxu0 %v477
    %1263 = vmatprep.subr.mxu0 %v480
    %1264 = vmatpush1.msra.mxu0 %v479
    %1265 = vmatprep.subr.mxu0 %v482
    %1266 = vmatpush1.msra.mxu0 %v481
    %1267 = vmatprep.subr.mxu0 0.0
    %1268 = vmatpush1.msra.mxu0 0.0
    %1269 = vmatprep.subr.mxu0 0.0
    %1270 = vmatpush1.msra.mxu0 0.0
    %1271 = vmatprep.subr.mxu0 0.0
    %1272 = vmatpush1.msra.mxu0 0.0
    %1273 = vmatprep.subr.mxu0 0.0
    %1274 = vmatpush1.msra.mxu0 0.0
    %1275 = vmatprep.subr.mxu0 0.0
    %1276 = vmatpush1.msra.mxu0 0.0
    %1277 = vmatprep.subr.mxu0 0.0
    %1278 = vmatpush1.msra.mxu0 0.0
    %1279 = vmatprep.subr.mxu0 0.0
    %1280 = vmatpush1.msra.mxu0 0.0
    %1281 = vmatprep.subr.mxu0 0.0
    %1282 = vmatpush1.msra.mxu0 0.0
    %1283 = vmatprep.subr.mxu0 0.0
    %1284 = vmatpush1.msra.mxu0 0.0
    %1285 = vmatprep.subr.mxu0 0.0
    %1286 = vmatpush1.msra.mxu0 0.0
    %1287 = vmatprep.subr.mxu0 0.0
    %1288 = vmatpush1.msra.mxu0 0.0
    %1289 = vmatprep.subr.mxu0 0.0
    %1290 = vmatpush1.msra.mxu0 0.0
    %1291 = vmatprep.subr.mxu0 0.0
    %1292 = vmatpush1.msra.mxu0 0.0
    %1293 = vmatprep.subr.mxu0 0.0
    %1294 = vmatpush1.msra.mxu0 0.0
    %1295 = vmatprep.subr.mxu0 0.0
    %1296 = vmatpush1.msra.mxu0 0.0
    %1297 = vmatprep.subr.mxu0 0.0
    %1298 = vmatpush1.msra.mxu0 0.0
    %1299 = vmatprep.subr.mxu0 0.0
    %1300 = vmatpush1.msra.mxu0 0.0
    %1301 = vmatprep.subr.mxu0 0.0
    %1302 = vmatpush1.msra.mxu0 0.0
    %1303 = vmatprep.subr.mxu0 0.0
    %1304 = vmatpush1.msra.mxu0 0.0
    %1305 = vmatprep.subr.mxu0 0.0
    %1306 = vmatpush1.msra.mxu0 0.0
    %1307 = vmatprep.subr.mxu0 0.0
    %1308 = vmatpush1.msra.mxu0 0.0
    %1309 = vmatprep.subr.mxu0 0.0
    %1310 = vmatpush1.msra.mxu0 0.0
    %1311 = vmatprep.subr.mxu0 0.0
    %1312 = vmatpush1.msra.mxu0 0.0
    %1313 = vmatprep.subr.mxu0 0.0
    %1314 = vmatpush1.msra.mxu0 0.0
    %1315 = vmatprep.mubr.f32.mxu0 0.0
    %1316 = vmatmul.mubr.f32.gmra.mrb[0].mxu0 %v1249
    %v1317 = vpop.f32.mrb[0].mxu0
    %v1318 = vadd.f32 0.0, %v1317
    %v1319 = vpop.f32.mrb[0].mxu0
    %v1320 = vadd.f32 0.0, %v1319
    %1321 = vdwg.mxu0
    %v1322 = vadd.f32 %v1246, %v1318
    %v1323 = vadd.f32 %v1247, %v1320
    %v1324 = vtanh.pop %v1322
    %v1325 = vmul.f32 %v1324, 0.5
    %v1326 = vadd.f32 %v1325, 0.5
    %v1327 = vtanh.pop %v1323
    %v1328 = vmul.f32 %v1327, %v99
    %v1329 = vadd.f32 %v1328, %v100
    %v1330 = vmul.f32 %v1326, %v1329
    %v1331 = vmul.f32 %v1326, %v1152
    %1333 = vrot.lane.b32.xlu0 %v1330, 64
    %v1334 = vpop.permute.xlu0 %1333
    %v1336 = vadd.f32 %v1331, %v1334
    %v1337 = vtanh.pop %v1336
    %v1338 = vmul.f32 %v1329, %v1337
    %1340 = vrot.lane.b32.xlu0 %v1245, 64
    %v1341 = vpop.permute.xlu0 %1340
    %v1343 = vsel %vm375, %v1338, %v1341
    %1344 = vmatprep.subr.mxu0 %v577
    %1345 = vmatpush1.msra.mxu0 %v576
    %1346 = vmatprep.subr.mxu0 %v579
    %1347 = vmatpush1.msra.mxu0 %v578
    %1348 = vmatprep.subr.mxu0 %v581
    %1349 = vmatpush1.msra.mxu0 %v580
    %1350 = vmatprep.subr.mxu0 %v583
    %1351 = vmatpush1.msra.mxu0 %v582
    %1352 = vmatprep.subr.mxu0 %v585
    %1353 = vmatpush1.msra.mxu0 %v584
    %1354 = vmatprep.subr.mxu0 %v587
    %1355 = vmatpush1.msra.mxu0 %v586
    %1356 = vmatprep.subr.mxu0 %v589
    %1357 = vmatpush1.msra.mxu0 %v588
    %1358 = vmatprep.subr.mxu0 %v591
    %1359 = vmatpush1.msra.mxu0 %v590
    %1360 = vmatprep.subr.mxu0 %v593
    %1361 = vmatpush1.msra.mxu0 %v592
    %1362 = vmatprep.subr.mxu0 %v595
    %1363 = vmatpush1.msra.mxu0 %v594
    %1364 = vmatprep.subr.mxu0 %v597
    %1365 = vmatpush1.msra.mxu0 %v596
    %1366 = vmatprep.subr.mxu0 %v599
    %1367 = vmatpush1.msra.mxu0 %v598
    %1368 = vmatprep.subr.mxu0 %v601
    %1369 = vmatpush1.msra.mxu0 %v600
    %1370 = vmatprep.subr.mxu0 %v603
    %1371 = vmatpush1.msra.mxu0 %v602
    %1372 = vmatprep.subr.mxu0 %v605
    %1373 = vmatpush1.msra.mxu0 %v604
    %1374 = vmatprep.subr.mxu0 %v607
    %1375 = vmatpush1.msra.mxu0 %v606
    %1376 = vmatprep.subr.mxu0 0.0
    %1377 = vmatpush1.msra.mxu0 0.0
    %1378 = vmatprep.subr.mxu0 0.0
    %1379 = vmatpush1.msra.mxu0 0.0
    %1380 = vmatprep.subr.mxu0 0.0
    %1381 = vmatpush1.msra.mxu0 0.0
    %1382 = vmatprep.subr.mxu0 0.0
    %1383 = vmatpush1.msra.mxu0 0.0
    %1384 = vmatprep.subr.mxu0 0.0
    %1385 = vmatpush1.msra.mxu0 0.0
    %1386 = vmatprep.subr.mxu0 0.0
    %1387 = vmatpush1.msra.mxu0 0.0
    %1388 = vmatprep.subr.mxu0 0.0
    %1389 = vmatpush1.msra.mxu0 0.0
    %1390 = vmatprep.subr.mxu0 0.0
    %1391 = vmatpush1.msra.mxu0 0.0
    %1392 = vmatprep.subr.mxu0 0.0
    %1393 = vmatpush1.msra.mxu0 0.0
    %1394 = vmatprep.subr.mxu0 0.0
    %1395 = vmatpush1.msra.mxu0 0.0
    %1396 = vmatprep.subr.mxu0 0.0
    %1397 = vmatpush1.msra.mxu0 0.0
    %1398 = vmatprep.subr.mxu0 0.0
    %1399 = vmatpush1.msra.mxu0 0.0
    %1400 = vmatprep.subr.mxu0 0.0
    %1401 = vmatpush1.msra.mxu0 0.0
    %1402 = vmatprep.subr.mxu0 0.0
    %1403 = vmatpush1.msra.mxu0 0.0
    %1404 = vmatprep.subr.mxu0 0.0
    %1405 = vmatpush1.msra.mxu0 0.0
    %1406 = vmatprep.subr.mxu0 0.0
    %1407 = vmatpush1.msra.mxu0 0.0
    %1408 = vmatprep.mubr.f32.mxu0 0.0
    %1409 = vmatmul.mubr.f32.gmra.mrb[0].mxu0 %v1343
    %v1410 = vpop.f32.mrb[0].mxu0
    %v1411 = vadd.f32 %v101, %v1410
    %v1412 = vpop.f32.mrb[0].mxu0
    %v1413 = vadd.f32 %v102, %v1412
    %1414 = vdwg.mxu0
    %v1415 = vtanh.pop %v1411
    %v1416 = vmul.f32 %v1415, 0.5
    %v1417 = vadd.f32 %v1416, 0.5
    %v1418 = vtanh.pop %v1413
    %v1419 = vmul.f32 %v1418, %v99
    %v1420 = vadd.f32 %v1419, %v100
    %v1421 = vmul.f32 %v1417, %v1420
    %v1422 = vmul.f32 %v1417, %v1243
    %1424 = vrot.lane.b32.xlu0 %v1421, 64
    %v1425 = vpop.permute.xlu0 %1424
    %v1427 = vadd.f32 %v1422, %v1425
    %v1428 = vtanh.pop %v1427
    %v1429 = vmul.f32 %v1420, %v1428
    %v1430 = vld [vmem:[#allocation2 + $0x50] sm:$0xff]
    %v1431 = vld [vmem:[#allocation2 + $0x58] sm:$0xff]
    %v1433 = vsel %vm375, %v1338, 0
    %1435 = vmatprep.subr.mxu0 %v468
    %1436 = vmatpush1.msra.mxu0 %v467
    %1437 = vmatprep.subr.mxu0 %v470
    %1438 = vmatpush1.msra.mxu0 %v469
    %1439 = vmatprep.subr.mxu0 %v472
    %1440 = vmatpush1.msra.mxu0 %v471
    %1441 = vmatprep.subr.mxu0 %v474
    %1442 = vmatpush1.msra.mxu0 %v473
    %1443 = vmatprep.subr.mxu0 %v476
    %1444 = vmatpush1.msra.mxu0 %v475
    %1445 = vmatprep.subr.mxu0 %v478
    %1446 = vmatpush1.msra.mxu0 %v477
    %1447 = vmatprep.subr.mxu0 %v480
    %1448 = vmatpush1.msra.mxu0 %v479
    %1449 = vmatprep.subr.mxu0 %v482
    %1450 = vmatpush1.msra.mxu0 %v481
    %1451 = vmatprep.subr.mxu0 0.0
    %1452 = vmatpush1.msra.mxu0 0.0
    %1453 = vmatprep.subr.mxu0 0.0
    %1454 = vmatpush1.msra.mxu0 0.0
    %1455 = vmatprep.subr.mxu0 0.0
    %1456 = vmatpush1.msra.mxu0 0.0
    %1457 = vmatprep.subr.mxu0 0.0
    %1458 = vmatpush1.msra.mxu0 0.0
    %1459 = vmatprep.subr.mxu0 0.0
    %1460 = vmatpush1.msra.mxu0 0.0
    %1461 = vmatprep.subr.mxu0 0.0
    %1462 = vmatpush1.msra.mxu0 0.0
    %1463 = vmatprep.subr.mxu0 0.0
    %1464 = vmatpush1.msra.mxu0 0.0
    %1465 = vmatprep.subr.mxu0 0.0
    %1466 = vmatpush1.msra.mxu0 0.0
    %1467 = vmatprep.subr.mxu0 0.0
    %1468 = vmatpush1.msra.mxu0 0.0
    %1469 = vmatprep.subr.mxu0 0.0
    %1470 = vmatpush1.msra.mxu0 0.0
    %1471 = vmatprep.subr.mxu0 0.0
    %1472 = vmatpush1.msra.mxu0 0.0
    %1473 = vmatprep.subr.mxu0 0.0
    %1474 = vmatpush1.msra.mxu0 0.0
    %1475 = vmatprep.subr.mxu0 0.0
    %1476 = vmatpush1.msra.mxu0 0.0
    %1477 = vmatprep.subr.mxu0 0.0
    %1478 = vmatpush1.msra.mxu0 0.0
    %1479 = vmatprep.subr.mxu0 0.0
    %1480 = vmatpush1.msra.mxu0 0.0
    %1481 = vmatprep.subr.mxu0 0.0
    %1482 = vmatpush1.msra.mxu0 0.0
    %1483 = vmatprep.subr.mxu0 0.0
    %1484 = vmatpush1.msra.mxu0 0.0
    %1485 = vmatprep.subr.mxu0 0.0
    %1486 = vmatpush1.msra.mxu0 0.0
    %1487 = vmatprep.subr.mxu0 0.0
    %1488 = vmatpush1.msra.mxu0 0.0
    %1489 = vmatprep.subr.mxu0 0.0
    %1490 = vmatpush1.msra.mxu0 0.0
    %1491 = vmatprep.subr.mxu0 0.0
    %1492 = vmatpush1.msra.mxu0 0.0
    %1493 = vmatprep.subr.mxu0 0.0
    %1494 = vmatpush1.msra.mxu0 0.0
    %1495 = vmatprep.subr.mxu0 0.0
    %1496 = vmatpush1.msra.mxu0 0.0
    %1497 = vmatprep.subr.mxu0 0.0
    %1498 = vmatpush1.msra.mxu0 0.0
    %1499 = vmatprep.mubr.f32.mxu0 0.0
    %1500 = vmatmul.mubr.f32.gmra.mrb[0].mxu0 %v1433
    %v1501 = vpop.f32.mrb[0].mxu0
    %v1502 = vadd.f32 0.0, %v1501
    %v1503 = vpop.f32.mrb[0].mxu0
    %v1504 = vadd.f32 0.0, %v1503
    %1505 = vdwg.mxu0
    %v1506 = vadd.f32 %v1430, %v1502
    %v1507 = vadd.f32 %v1431, %v1504
    %v1508 = vtanh.pop %v1506
    %v1509 = vmul.f32 %v1508, 0.5
    %v1510 = vadd.f32 %v1509, 0.5
    %v1511 = vtanh.pop %v1507
    %v1512 = vmul.f32 %v1511, %v99
    %v1513 = vadd.f32 %v1512, %v100
    %v1514 = vmul.f32 %v1510, %v1513
    %v1515 = vmul.f32 %v1510, %v1336
    %1517 = vrot.lane.b32.xlu0 %v1514, 64
    %v1518 = vpop.permute.xlu0 %1517
    %v1520 = vadd.f32 %v1515, %v1518
    %v1521 = vtanh.pop %v1520
    %v1522 = vmul.f32 %v1513, %v1521
    %1524 = vrot.lane.b32.xlu0 %v1429, 64
    %v1525 = vpop.permute.xlu0 %1524
    %v1527 = vsel %vm375, %v1522, %v1525
    %1528 = vmatprep.subr.mxu0 %v577
    %1529 = vmatpush1.msra.mxu0 %v576
    %1530 = vmatprep.subr.mxu0 %v579
    %1531 = vmatpush1.msra.mxu0 %v578
    %1532 = vmatprep.subr.mxu0 %v581
    %1533 = vmatpush1.msra.mxu0 %v580
    %1534 = vmatprep.subr.mxu0 %v583
    %1535 = vmatpush1.msra.mxu0 %v582
    %1536 = vmatprep.subr.mxu0 %v585
    %1537 = vmatpush1.msra.mxu0 %v584
    %1538 = vmatprep.subr.mxu0 %v587
    %1539 = vmatpush1.msra.mxu0 %v586
    %1540 = vmatprep.subr.mxu0 %v589
    %1541 = vmatpush1.msra.mxu0 %v588
    %1542 = vmatprep.subr.mxu0 %v591
    %1543 = vmatpush1.msra.mxu0 %v590
    %1544 = vmatprep.subr.mxu0 %v593
    %1545 = vmatpush1.msra.mxu0 %v592
    %1546 = vmatprep.subr.mxu0 %v595
    %1547 = vmatpush1.msra.mxu0 %v594
    %1548 = vmatprep.subr.mxu0 %v597
    %1549 = vmatpush1.msra.mxu0 %v596
    %1550 = vmatprep.subr.mxu0 %v599
    %1551 = vmatpush1.msra.mxu0 %v598
    %1552 = vmatprep.subr.mxu0 %v601
    %1553 = vmatpush1.msra.mxu0 %v600
    %1554 = vmatprep.subr.mxu0 %v603
    %1555 = vmatpush1.msra.mxu0 %v602
    %1556 = vmatprep.subr.mxu0 %v605
    %1557 = vmatpush1.msra.mxu0 %v604
    %1558 = vmatprep.subr.mxu0 %v607
    %1559 = vmatpush1.msra.mxu0 %v606
    %1560 = vmatprep.subr.mxu0 0.0
    %1561 = vmatpush1.msra.mxu0 0.0
    %1562 = vmatprep.subr.mxu0 0.0
    %1563 = vmatpush1.msra.mxu0 0.0
    %1564 = vmatprep.subr.mxu0 0.0
    %1565 = vmatpush1.msra.mxu0 0.0
    %1566 = vmatprep.subr.mxu0 0.0
    %1567 = vmatpush1.msra.mxu0 0.0
    %1568 = vmatprep.subr.mxu0 0.0
    %1569 = vmatpush1.msra.mxu0 0.0
    %1570 = vmatprep.subr.mxu0 0.0
    %1571 = vmatpush1.msra.mxu0 0.0
    %1572 = vmatprep.subr.mxu0 0.0
    %1573 = vmatpush1.msra.mxu0 0.0
    %1574 = vmatprep.subr.mxu0 0.0
    %1575 = vmatpush1.msra.mxu0 0.0
    %1576 = vmatprep.subr.mxu0 0.0
    %1577 = vmatpush1.msra.mxu0 0.0
    %1578 = vmatprep.subr.mxu0 0.0
    %1579 = vmatpush1.msra.mxu0 0.0
    %1580 = vmatprep.subr.mxu0 0.0
    %1581 = vmatpush1.msra.mxu0 0.0
    %1582 = vmatprep.subr.mxu0 0.0
    %1583 = vmatpush1.msra.mxu0 0.0
    %1584 = vmatprep.subr.mxu0 0.0
    %1585 = vmatpush1.msra.mxu0 0.0
    %1586 = vmatprep.subr.mxu0 0.0
    %1587 = vmatpush1.msra.mxu0 0.0
    %1588 = vmatprep.subr.mxu0 0.0
    %1589 = vmatpush1.msra.mxu0 0.0
    %1590 = vmatprep.subr.mxu0 0.0
    %1591 = vmatpush1.msra.mxu0 0.0
    %1592 = vmatprep.mubr.f32.mxu0 0.0
    %1593 = vmatmul.mubr.f32.gmra.mrb[0].mxu0 %v1527
    %v1594 = vpop.f32.mrb[0].mxu0
    %v1595 = vadd.f32 %v101, %v1594
    %v1596 = vpop.f32.mrb[0].mxu0
    %v1597 = vadd.f32 %v102, %v1596
    %1598 = vdwg.mxu0
    %v1599 = vtanh.pop %v1595
    %v1600 = vmul.f32 %v1599, 0.5
    %v1601 = vadd.f32 %v1600, 0.5
    %v1602 = vtanh.pop %v1597
    %v1603 = vmul.f32 %v1602, %v99
    %v1604 = vadd.f32 %v1603, %v100
    %v1605 = vmul.f32 %v1601, %v1604
    %v1606 = vmul.f32 %v1601, %v1427
    %1608 = vrot.lane.b32.xlu0 %v1605, 64
    %v1609 = vpop.permute.xlu0 %1608
    %v1611 = vadd.f32 %v1606, %v1609
    %v1612 = vtanh.pop %v1611
    %v1613 = vmul.f32 %v1604, %v1612
    %v1614 = vld [vmem:[#allocation2 + $0x60] sm:$0xff]
    %v1615 = vld [vmem:[#allocation2 + $0x68] sm:$0xff]
    %v1617 = vsel %vm375, %v1522, 0
    %1619 = vmatprep.subr.mxu0 %v468
    %1620 = vmatpush1.msra.mxu0 %v467
    %1621 = vmatprep.subr.mxu0 %v470
    %1622 = vmatpush1.msra.mxu0 %v469
    %1623 = vmatprep.subr.mxu0 %v472
    %1624 = vmatpush1.msra.mxu0 %v471
    %1625 = vmatprep.subr.mxu0 %v474
    %1626 = vmatpush1.msra.mxu0 %v473
    %1627 = vmatprep.subr.mxu0 %v476
    %1628 = vmatpush1.msra.mxu0 %v475
    %1629 = vmatprep.subr.mxu0 %v478
    %1630 = vmatpush1.msra.mxu0 %v477
    %1631 = vmatprep.subr.mxu0 %v480
    %1632 = vmatpush1.msra.mxu0 %v479
    %1633 = vmatprep.subr.mxu0 %v482
    %1634 = vmatpush1.msra.mxu0 %v481
    %1635 = vmatprep.subr.mxu0 0.0
    %1636 = vmatpush1.msra.mxu0 0.0
    %1637 = vmatprep.subr.mxu0 0.0
    %1638 = vmatpush1.msra.mxu0 0.0
    %1639 = vmatprep.subr.mxu0 0.0
    %1640 = vmatpush1.msra.mxu0 0.0
    %1641 = vmatprep.subr.mxu0 0.0
    %1642 = vmatpush1.msra.mxu0 0.0
    %1643 = vmatprep.subr.mxu0 0.0
    %1644 = vmatpush1.msra.mxu0 0.0
    %1645 = vmatprep.subr.mxu0 0.0
    %1646 = vmatpush1.msra.mxu0 0.0
    %1647 = vmatprep.subr.mxu0 0.0
    %1648 = vmatpush1.msra.mxu0 0.0
    %1649 = vmatprep.subr.mxu0 0.0
    %1650 = vmatpush1.msra.mxu0 0.0
    %1651 = vmatprep.subr.mxu0 0.0
    %1652 = vmatpush1.msra.mxu0 0.0
    %1653 = vmatprep.subr.mxu0 0.0
    %1654 = vmatpush1.msra.mxu0 0.0
    %1655 = vmatprep.subr.mxu0 0.0
    %1656 = vmatpush1.msra.mxu0 0.0
    %1657 = vmatprep.subr.mxu0 0.0
    %1658 = vmatpush1.msra.mxu0 0.0
    %1659 = vmatprep.subr.mxu0 0.0
    %1660 = vmatpush1.msra.mxu0 0.0
    %1661 = vmatprep.subr.mxu0 0.0
    %1662 = vmatpush1.msra.mxu0 0.0
    %1663 = vmatprep.subr.mxu0 0.0
    %1664 = vmatpush1.msra.mxu0 0.0
    %1665 = vmatprep.subr.mxu0 0.0
    %1666 = vmatpush1.msra.mxu0 0.0
    %1667 = vmatprep.subr.mxu0 0.0
    %1668 = vmatpush1.msra.mxu0 0.0
    %1669 = vmatprep.subr.mxu0 0.0
    %1670 = vmatpush1.msra.mxu0 0.0
    %1671 = vmatprep.subr.mxu0 0.0
    %1672 = vmatpush1.msra.mxu0 0.0
    %1673 = vmatprep.subr.mxu0 0.0
    %1674 = vmatpush1.msra.mxu0 0.0
    %1675 = vmatprep.subr.mxu0 0.0
    %1676 = vmatpush1.msra.mxu0 0.0
    %1677 = vmatprep.subr.mxu0 0.0
    %1678 = vmatpush1.msra.mxu0 0.0
    %1679 = vmatprep.subr.mxu0 0.0
    %1680 = vmatpush1.msra.mxu0 0.0
    %1681 = vmatprep.subr.mxu0 0.0
    %1682 = vmatpush1.msra.mxu0 0.0
    %1683 = vmatprep.mubr.f32.mxu0 0.0
    %1684 = vmatmul.mubr.f32.gmra.mrb[0].mxu0 %v1617
    %v1685 = vpop.f32.mrb[0].mxu0
    %v1686 = vadd.f32 0.0, %v1685
    %v1687 = vpop.f32.mrb[0].mxu0
    %v1688 = vadd.f32 0.0, %v1687
    %1689 = vdwg.mxu0
    %v1690 = vadd.f32 %v1614, %v1686
    %v1691 = vadd.f32 %v1615, %v1688
    %v1692 = vtanh.pop %v1690
    %v1693 = vmul.f32 %v1692, 0.5
    %v1694 = vadd.f32 %v1693, 0.5
    %v1695 = vtanh.pop %v1691
    %v1696 = vmul.f32 %v1695, %v99
    %v1697 = vadd.f32 %v1696, %v100
    %v1698 = vmul.f32 %v1694, %v1697
    %v1699 = vmul.f32 %v1694, %v1520
    %1701 = vrot.lane.b32.xlu0 %v1698, 64
    %v1702 = vpop.permute.xlu0 %1701
    %v1704 = vadd.f32 %v1699, %v1702
    %v1705 = vtanh.pop %v1704
    %v1706 = vmul.f32 %v1697, %v1705
    %1708 = vrot.lane.b32.xlu0 %v1613, 64
    %v1709 = vpop.permute.xlu0 %1708
    %v1711 = vsel %vm375, %v1706, %v1709
    %1712 = vmatprep.subr.mxu0 %v577
    %1713 = vmatpush1.msra.mxu0 %v576
    %1714 = vmatprep.subr.mxu0 %v579
    %1715 = vmatpush1.msra.mxu0 %v578
    %1716 = vmatprep.subr.mxu0 %v581
    %1717 = vmatpush1.msra.mxu0 %v580
    %1718 = vmatprep.subr.mxu0 %v583
    %1719 = vmatpush1.msra.mxu0 %v582
    %1720 = vmatprep.subr.mxu0 %v585
    %1721 = vmatpush1.msra.mxu0 %v584
    %1722 = vmatprep.subr.mxu0 %v587
    %1723 = vmatpush1.msra.mxu0 %v586
    %1724 = vmatprep.subr.mxu0 %v589
    %1725 = vmatpush1.msra.mxu0 %v588
    %1726 = vmatprep.subr.mxu0 %v591
    %1727 = vmatpush1.msra.mxu0 %v590
    %1728 = vmatprep.subr.mxu0 %v593
    %1729 = vmatpush1.msra.mxu0 %v592
    %1730 = vmatprep.subr.mxu0 %v595
    %1731 = vmatpush1.msra.mxu0 %v594
    %1732 = vmatprep.subr.mxu0 %v597
    %1733 = vmatpush1.msra.mxu0 %v596
    %1734 = vmatprep.subr.mxu0 %v599
    %1735 = vmatpush1.msra.mxu0 %v598
    %1736 = vmatprep.subr.mxu0 %v601
    %1737 = vmatpush1.msra.mxu0 %v600
    %1738 = vmatprep.subr.mxu0 %v603
    %1739 = vmatpush1.msra.mxu0 %v602
    %1740 = vmatprep.subr.mxu0 %v605
    %1741 = vmatpush1.msra.mxu0 %v604
    %1742 = vmatprep.subr.mxu0 %v607
    %1743 = vmatpush1.msra.mxu0 %v606
    %1744 = vmatprep.subr.mxu0 0.0
    %1745 = vmatpush1.msra.mxu0 0.0
    %1746 = vmatprep.subr.mxu0 0.0
    %1747 = vmatpush1.msra.mxu0 0.0
    %1748 = vmatprep.subr.mxu0 0.0
    %1749 = vmatpush1.msra.mxu0 0.0
    %1750 = vmatprep.subr.mxu0 0.0
    %1751 = vmatpush1.msra.mxu0 0.0
    %1752 = vmatprep.subr.mxu0 0.0
    %1753 = vmatpush1.msra.mxu0 0.0
    %1754 = vmatprep.subr.mxu0 0.0
    %1755 = vmatpush1.msra.mxu0 0.0
    %1756 = vmatprep.subr.mxu0 0.0
    %1757 = vmatpush1.msra.mxu0 0.0
    %1758 = vmatprep.subr.mxu0 0.0
    %1759 = vmatpush1.msra.mxu0 0.0
    %1760 = vmatprep.subr.mxu0 0.0
    %1761 = vmatpush1.msra.mxu0 0.0
    %1762 = vmatprep.subr.mxu0 0.0
    %1763 = vmatpush1.msra.mxu0 0.0
    %1764 = vmatprep.subr.mxu0 0.0
    %1765 = vmatpush1.msra.mxu0 0.0
    %1766 = vmatprep.subr.mxu0 0.0
    %1767 = vmatpush1.msra.mxu0 0.0
    %1768 = vmatprep.subr.mxu0 0.0
    %1769 = vmatpush1.msra.mxu0 0.0
    %1770 = vmatprep.subr.mxu0 0.0
    %1771 = vmatpush1.msra.mxu0 0.0
    %1772 = vmatprep.subr.mxu0 0.0
    %1773 = vmatpush1.msra.mxu0 0.0
    %1774 = vmatprep.subr.mxu0 0.0
    %1775 = vmatpush1.msra.mxu0 0.0
    %1776 = vmatprep.mubr.f32.mxu0 0.0
    %1777 = vmatmul.mubr.f32.gmra.mrb[0].mxu0 %v1711
    %v1778 = vpop.f32.mrb[0].mxu0
    %v1779 = vadd.f32 %v101, %v1778
    %v1780 = vpop.f32.mrb[0].mxu0
    %v1781 = vadd.f32 %v102, %v1780
    %1782 = vdwg.mxu0
    %v1783 = vtanh.pop %v1779
    %v1784 = vmul.f32 %v1783, 0.5
    %v1785 = vadd.f32 %v1784, 0.5
    %v1786 = vtanh.pop %v1781
    %v1787 = vmul.f32 %v1786, %v99
    %v1788 = vadd.f32 %v1787, %v100
    %v1789 = vmul.f32 %v1785, %v1788
    %v1790 = vmul.f32 %v1785, %v1611
    %1792 = vrot.lane.b32.xlu0 %v1789, 64
    %v1793 = vpop.permute.xlu0 %1792
    %v1795 = vadd.f32 %v1790, %v1793
    %v1796 = vtanh.pop %v1795
    %v1797 = vmul.f32 %v1788, %v1796
    %v1798 = vld [vmem:[%s6] sm:$0xff]
    %v1799 = vld [vmem:[%s6 + $0x8] sm:$0xff]
    %v1800 = vld [vmem:[%s6 + $0x10] sm:$0xff]
    %v1801 = vld [vmem:[%s6 + $0x18] sm:$0xff]
    %v1802 = vld [vmem:[%s6 + $0x20] sm:$0xff]
    %v1803 = vld [vmem:[%s6 + $0x28] sm:$0xff]
    %v1804 = vld [vmem:[%s6 + $0x30] sm:$0xff]
    %v1805 = vld [vmem:[%s6 + $0x38] sm:$0xff]
    %v1806 = vld [vmem:[%s7] sm:$0x1]
    %v1808 = vlaneseq
    %v1809 = vshrl.u32 %v1808, 7
    %v1810 = vsub.s32 0, %v1809
    %v1811 = vrot.slane %v1806, %v1810
    %v1814 = vsel %vm375, %v1797, 0
    %1816 = vmatprep.subr.mxu0 0.0
    %1817 = vmatpush1.msra.mxu0 %v1798
    %1818 = vmatprep.subr.mxu0 0.0
    %1819 = vmatpush1.msra.mxu0 %v1799
    %1820 = vmatprep.subr.mxu0 0.0
    %1821 = vmatpush1.msra.mxu0 %v1800
    %1822 = vmatprep.subr.mxu0 0.0
    %1823 = vmatpush1.msra.mxu0 %v1801
    %1824 = vmatprep.subr.mxu0 0.0
    %1825 = vmatpush1.msra.mxu0 %v1802
    %1826 = vmatprep.subr.mxu0 0.0
    %1827 = vmatpush1.msra.mxu0 %v1803
    %1828 = vmatprep.subr.mxu0 0.0
    %1829 = vmatpush1.msra.mxu0 %v1804
    %1830 = vmatprep.subr.mxu0 0.0
    %1831 = vmatpush1.msra.mxu0 %v1805
    %1832 = vmatprep.subr.mxu0 0.0
    %1833 = vmatpush1.msra.mxu0 0.0
    %1834 = vmatprep.subr.mxu0 0.0
    %1835 = vmatpush1.msra.mxu0 0.0
    %1836 = vmatprep.subr.mxu0 0.0
    %1837 = vmatpush1.msra.mxu0 0.0
    %1838 = vmatprep.subr.mxu0 0.0
    %1839 = vmatpush1.msra.mxu0 0.0
    %1840 = vmatprep.subr.mxu0 0.0
    %1841 = vmatpush1.msra.mxu0 0.0
    %1842 = vmatprep.subr.mxu0 0.0
    %1843 = vmatpush1.msra.mxu0 0.0
    %1844 = vmatprep.subr.mxu0 0.0
    %1845 = vmatpush1.msra.mxu0 0.0
    %1846 = vmatprep.subr.mxu0 0.0
    %1847 = vmatpush1.msra.mxu0 0.0
    %1848 = vmatprep.subr.mxu0 0.0
    %1849 = vmatpush1.msra.mxu0 0.0
    %1850 = vmatprep.subr.mxu0 0.0
    %1851 = vmatpush1.msra.mxu0 0.0
    %1852 = vmatprep.subr.mxu0 0.0
    %1853 = vmatpush1.msra.mxu0 0.0
    %1854 = vmatprep.subr.mxu0 0.0
    %1855 = vmatpush1.msra.mxu0 0.0
    %1856 = vmatprep.subr.mxu0 0.0
    %1857 = vmatpush1.msra.mxu0 0.0
    %1858 = vmatprep.subr.mxu0 0.0
    %1859 = vmatpush1.msra.mxu0 0.0
    %1860 = vmatprep.subr.mxu0 0.0
    %1861 = vmatpush1.msra.mxu0 0.0
    %1862 = vmatprep.subr.mxu0 0.0
    %1863 = vmatpush1.msra.mxu0 0.0
    %1864 = vmatprep.subr.mxu0 0.0
    %1865 = vmatpush1.msra.mxu0 0.0
    %1866 = vmatprep.subr.mxu0 0.0
    %1867 = vmatpush1.msra.mxu0 0.0
    %1868 = vmatprep.subr.mxu0 0.0
    %1869 = vmatpush1.msra.mxu0 0.0
    %1870 = vmatprep.subr.mxu0 0.0
    %1871 = vmatpush1.msra.mxu0 0.0
    %1872 = vmatprep.subr.mxu0 0.0
    %1873 = vmatpush1.msra.mxu0 0.0
    %1874 = vmatprep.subr.mxu0 0.0
    %1875 = vmatpush1.msra.mxu0 0.0
    %1876 = vmatprep.subr.mxu0 0.0
    %1877 = vmatpush1.msra.mxu0 0.0
    %1878 = vmatprep.subr.mxu0 0.0
    %1879 = vmatpush1.msra.mxu0 0.0
    %1880 = vmatprep.mubr.f32.mxu0 0.0
    %1881 = vmatmul.mubr.f32.gmra.mrb[0].mxu0 %v1814
    %v1882 = vpop.f32.mrb[0].mxu0
    %v1883 = vadd.f32 %v1811, %v1882
    %v1884 = vpop.f32.mrb[0].mxu0
    %1885 = vdwg.mxu0
    %vm1886 = vcmp.gt.f32.partialorder %v1883, 0.0
    %v1887 = vmul.f32 %v1883, 0.01
    %v1888 = vsel %vm1886, %v1883, %v1887
    %v1889 = vld [vmem:[#allocation9] sm:$0xff]
    %v1890 = vld [vmem:[#allocation9 + $0x8] sm:$0xff]
    %v1891 = vld [vmem:[#allocation9 + $0x10] sm:$0xff]
    %v1892 = vld [vmem:[#allocation9 + $0x18] sm:$0xff]
    %v1893 = vld [vmem:[#allocation9 + $0x20] sm:$0xff]
    %v1894 = vld [vmem:[#allocation9 + $0x28] sm:$0xff]
    %v1895 = vld [vmem:[#allocation9 + $0x30] sm:$0xff]
    %v1896 = vld [vmem:[#allocation9 + $0x38] sm:$0xff]
    %v1897 = vld [vmem:[%s9] sm:$0x1]
    %v1899 = vlaneseq
    %v1900 = vshrl.u32 %v1899, 7
    %v1901 = vsub.s32 0, %v1900
    %v1902 = vrot.slane %v1897, %v1901
    %v1905 = vsel %vm375, %v1888, 0
    %1907 = vmatprep.subr.mxu0 0.0
    %1908 = vmatpush1.msra.mxu0 %v1889
    %1909 = vmatprep.subr.mxu0 0.0
    %1910 = vmatpush1.msra.mxu0 %v1890
    %1911 = vmatprep.subr.mxu0 0.0
    %1912 = vmatpush1.msra.mxu0 %v1891
    %1913 = vmatprep.subr.mxu0 0.0
    %1914 = vmatpush1.msra.mxu0 %v1892
    %1915 = vmatprep.subr.mxu0 0.0
    %1916 = vmatpush1.msra.mxu0 %v1893
    %1917 = vmatprep.subr.mxu0 0.0
    %1918 = vmatpush1.msra.mxu0 %v1894
    %1919 = vmatprep.subr.mxu0 0.0
    %1920 = vmatpush1.msra.mxu0 %v1895
    %1921 = vmatprep.subr.mxu0 0.0
    %1922 = vmatpush1.msra.mxu0 %v1896
    %1923 = vmatprep.subr.mxu0 0.0
    %1924 = vmatpush1.msra.mxu0 0.0
    %1925 = vmatprep.subr.mxu0 0.0
    %1926 = vmatpush1.msra.mxu0 0.0
    %1927 = vmatprep.subr.mxu0 0.0
    %1928 = vmatpush1.msra.mxu0 0.0
    %1929 = vmatprep.subr.mxu0 0.0
    %1930 = vmatpush1.msra.mxu0 0.0
    %1931 = vmatprep.subr.mxu0 0.0
    %1932 = vmatpush1.msra.mxu0 0.0
    %1933 = vmatprep.subr.mxu0 0.0
    %1934 = vmatpush1.msra.mxu0 0.0
    %1935 = vmatprep.subr.mxu0 0.0
    %1936 = vmatpush1.msra.mxu0 0.0
    %1937 = vmatprep.subr.mxu0 0.0
    %1938 = vmatpush1.msra.mxu0 0.0
    %1939 = vmatprep.subr.mxu0 0.0
    %1940 = vmatpush1.msra.mxu0 0.0
    %1941 = vmatprep.subr.mxu0 0.0
    %1942 = vmatpush1.msra.mxu0 0.0
    %1943 = vmatprep.subr.mxu0 0.0
    %1944 = vmatpush1.msra.mxu0 0.0
    %1945 = vmatprep.subr.mxu0 0.0
    %1946 = vmatpush1.msra.mxu0 0.0
    %1947 = vmatprep.subr.mxu0 0.0
    %1948 = vmatpush1.msra.mxu0 0.0
    %1949 = vmatprep.subr.mxu0 0.0
    %1950 = vmatpush1.msra.mxu0 0.0
    %1951 = vmatprep.subr.mxu0 0.0
    %1952 = vmatpush1.msra.mxu0 0.0
    %1953 = vmatprep.subr.mxu0 0.0
    %1954 = vmatpush1.msra.mxu0 0.0
    %1955 = vmatprep.subr.mxu0 0.0
    %1956 = vmatpush1.msra.mxu0 0.0
    %1957 = vmatprep.subr.mxu0 0.0
    %1958 = vmatpush1.msra.mxu0 0.0
    %1959 = vmatprep.subr.mxu0 0.0
    %1960 = vmatpush1.msra.mxu0 0.0
    %1961 = vmatprep.subr.mxu0 0.0
    %1962 = vmatpush1.msra.mxu0 0.0
    %1963 = vmatprep.subr.mxu0 0.0
    %1964 = vmatpush1.msra.mxu0 0.0
    %1965 = vmatprep.subr.mxu0 0.0
    %1966 = vmatpush1.msra.mxu0 0.0
    %1967 = vmatprep.subr.mxu0 0.0
    %1968 = vmatpush1.msra.mxu0 0.0
    %1969 = vmatprep.subr.mxu0 0.0
    %1970 = vmatpush1.msra.mxu0 0.0
    %1971 = vmatprep.mubr.f32.mxu0 0.0
    %1972 = vmatmul.mubr.f32.gmra.mrb[0].mxu0 %v1905
    %v1973 = vpop.f32.mrb[0].mxu0
    %v1974 = vadd.f32 %v1902, %v1973
    %v1975 = vpop.f32.mrb[0].mxu0
    %1976 = vdwg.mxu0
    %vm1977 = vcmp.gt.f32.partialorder %v1974, 0.0
    %v1978 = vmul.f32 %v1974, 0.01
    %v1979 = vsel %vm1977, %v1974, %v1978
    %v1980 = vadd.f32 %v1979, %v1797
    %v1981 = vld [vmem:[%s10] sm:$0x1]
    %v1983 = vlaneseq
    %v1984 = vshrl.u32 %v1983, 7
    %v1985 = vsub.s32 0, %v1984
    %v1986 = vrot.slane %v1981, %v1985
    %v1988 = vmul.f32 %v1980, %v1986
    %v1989 = vsel %vm375, %v1988, 0.0
    %1990 = vadd.xlane.f32.xlu0 %v1989
    %v1991 = vpop.xlane.xlu0 %1990
    %v1992 = vld [vmem:[#allocation3] sm:$0x1]
    %v1994 = vlaneseq
    %v1995 = vshrl.u32 %v1994, 7
    %v1996 = vsub.s32 0, %v1995
    %v1997 = vrot.slane %v1992, %v1996
    %v1999 = vadd.f32 %v1991, %v1997
    %vm2000 = vcmp.gt.f32.partialorder %v1999, 0.0
    %v2001 = vmul.f32 %v1999, 0.01
    %v2002 = vsel %vm2000, %v1999, %v2001
    %vm2003 = vcmask 7168
    %2004 = vst.msk [vmem:[%s12] sm:$0xff] %vm2003, %v2002
    // Predicated region
    $region66: #{tpu_custom_call.1} parent=1 // pred_check
      _
    $region67: #{tpu_custom_call.1} parent=1 // pred_check_branch
      %2006 = sbr.rel (0) target = $region69
    $region68: #{tpu_custom_call.1} parent=1 // pred_region
      _
    $region69: #{tpu_custom_call.1} parent=1 // pred_fallthru
      _
    // Predicated region
    $region70: #{tpu_custom_call.1} parent=1 // pred_check
      _
    $region71: #{tpu_custom_call.1} parent=1 // pred_check_branch
      %2008 = sbr.rel (0) target = $region73
    $region72: #{tpu_custom_call.1} parent=1 // pred_region
      _
    $region73: #{tpu_custom_call.1} parent=1 // pred_fallthru
      _
    %2009 = vsyncpa [#allocation5], 1
    %2010 = vsyncpa [#allocation7], 1
    %2011 = vsyncpa [#allocation10], 1

</llo_original>
